<compile_context>
chip_gen: v7x
topology: tpu7x:2x2x1
jax: 0.10.0
libtpu: 0.0.40
codegen_flags: <defaults>
</compile_context>

<pallas_src>
import functools

import jax
import jax.numpy as jnp
from jax import lax
from jax.experimental import pallas as pl
from jax.experimental.pallas import tpu as pltpu

EPS = 1e-5
_MXU_MIN_K = 16           # below this contraction size, use unrolled VPU broadcast-MACs
_LANES = 128


def _attention_kernel(nT, TS0, hw, hw0, hw0_pad, compute_dtype, mxu_min_k, cache_g1,
                      g_ref, x0_ref,
                      wup_ref, bup_ref, wg_ref, bg_ref,
                      wx_ref, bx_ref, wpsi_ref, bpsi_ref,
                      out_ref, *scratch):
    # g_ref: (4, F_g, TS0) pixel-shuffle sub-images; x0_ref: (F_l, TS0); out_ref: (4, F_g, TS0)
    (sg1, ssg1, sx1, ssx1, spc, sspc, pc_buf, y_buf, x1_buf) = scratch[:9]
    g1_buf = scratch[9] if cache_g1 else None

    p = pl.program_id(1)          # pass: 0 = conv+cache+stats, 1 = psi, 2 = output
    t = pl.program_id(2)          # spatial tile index
    inv_hw = 1.0 / float(hw)      # high-res pixel count   (g1 / psi stats)
    inv_hw0 = 1.0 / float(hw0)    # low-res  pixel count   (x1 stats)

    if hw0_pad != hw0:            # lane-validity mask for the padded spatial tail
        lane = lax.broadcasted_iota(jnp.int32, (1, TS0), 1)
        mask = ((t * TS0 + lane) < hw0).astype(jnp.float32)
    else:
        mask = None

    def conv1x1(w_ref, b_ref, v):
        # v: (Cin, S) -> (Cout, S) f32
        cout, cin = w_ref.shape
        if cin < mxu_min_k:
            # Small-channel regime: unrolled VPU broadcast-MACs (exact f32, lane-dense).
            w = w_ref[...].astype(jnp.float32)
            vf = v.astype(jnp.float32)
            acc = w[:, 0:1] * vf[0:1, :]
            for c in range(1, cin):
                acc = acc + w[:, c:c + 1] * vf[c:c + 1, :]
            return acc + b_ref[...]
        v = v.astype(compute_dtype if compute_dtype is not None else jnp.float32)
        return jnp.dot(w_ref[...], v, preferred_element_type=jnp.float32) + b_ref[...]

    def acc_add(acc_ref, v):
        # Lane-partial accumulation (VALU only); cross-lane reduce deferred to consumption.
        part = v[:, 0:_LANES]
        for i in range(1, TS0 // _LANES):
            part = part + v[:, i * _LANES:(i + 1) * _LANES]
        acc_ref[...] += part

    def moments(sum_ref, sq_ref, inv_n):
        mu = jnp.sum(sum_ref[...], axis=1, keepdims=True) * inv_n
        ex2 = jnp.sum(sq_ref[...], axis=1, keepdims=True) * inv_n
        var = jnp.maximum(ex2 - mu * mu, 0.0)
        return mu, lax.rsqrt(var + EPS)

    # -------- pass 0: convs once, cache y / x1 (/ g1), accumulate InstanceNorm stats --------
    @pl.when(jnp.logical_and(p == 0, t == 0))
    def _init():
        for r in (sg1, ssg1, sx1, ssx1, spc, sspc):
            r[...] = jnp.zeros_like(r)

    @pl.when(p == 0)
    def _stats_pass():
        y = conv1x1(wup_ref, bup_ref, x0_ref[...])        # (F_g, TS0)  f32
        x1 = conv1x1(wx_ref, bx_ref, y)                   # (F_int, TS0) f32
        y_buf[t] = y.astype(y_buf.dtype)
        x1_buf[t] = x1.astype(x1_buf.dtype)
        x1m = x1 if mask is None else x1 * mask
        acc_add(sx1, x1m)
        acc_add(ssx1, x1m * x1m)

        def body(s, carry):                               # 4 pixel-shuffle sub-images
            g1 = conv1x1(wg_ref, bg_ref, g_ref[s])        # (F_int, TS0) f32
            if cache_g1:
                g1_buf[s * nT + t] = g1.astype(g1_buf.dtype)
            g1m = g1 if mask is None else g1 * mask
            acc_add(sg1, g1m)
            acc_add(ssg1, g1m * g1m)
            return carry
        lax.fori_loop(0, 4, body, 0)                      # bounded live ranges vs unroll

    # -------- pass 1: normalize, ReLU, psi conv; accumulate psi statistics ------------------
    @pl.when(p == 1)
    def _psi_pass():
        mu_g, inv_sd_g = moments(sg1, ssg1, inv_hw)
        mu_x, inv_sd_x = moments(sx1, ssx1, inv_hw0)
        x1n = (x1_buf[t].astype(jnp.float32) - mu_x) * inv_sd_x
        wpsi = wpsi_ref[...].astype(jnp.float32)          # (F_int, 1)
        bpsi = bpsi_ref[...]                              # (1, 1)
        for s in range(4):
            if cache_g1:
                g1 = g1_buf[s * nT + t].astype(jnp.float32)
            else:
                g1 = conv1x1(wg_ref, bg_ref, g_ref[s])
            g1n = (g1 - mu_g) * inv_sd_g
            pr = jnp.maximum(g1n + x1n, 0.0)
            # psi 1x1 conv (F_int -> 1) as a sublane reduce; avoids an N=1 MXU matmul.
            pc = jnp.sum(pr * wpsi, axis=0, keepdims=True) + bpsi     # (1, TS0)
            pc_buf[t, s:s + 1, :] = pc.astype(pc_buf.dtype)
            pcm = pc if mask is None else pc * mask
            acc_add(spc, pcm)
            acc_add(sspc, pcm * pcm)

    # -------- pass 2: normalize psi, sigmoid, gate cached y, write output -------------------
    @pl.when(p == 2)
    def _out_pass():
        mu_p, inv_sd_p = moments(spc, sspc, inv_hw)
        y = y_buf[t].astype(jnp.float32)                  # (F_g, TS0)
        for s in range(4):
            pc = pc_buf[t, s:s + 1, :].astype(jnp.float32)
            psi = jax.nn.sigmoid((pc - mu_p) * inv_sd_p)
            out_ref[s] = (y * psi).astype(out_ref.dtype)


def _plan(hw0, f_g, f_l, f_int, in_bytes, out_bytes, cache_bytes,
          max_lane_tile=None, force_cache_g1=None):
    """Pick spatial padding, lane tile, g1-caching and vmem_limit from device VMEM."""
    hw0_pad = ((hw0 + _LANES - 1) // _LANES) * _LANES
    m = hw0_pad // _LANES
    try:
        cap = int(getattr(pltpu.get_tpu_info(), "vmem_capacity_bytes", 64 * 1024 * 1024))
    except Exception:
        cap = 64 * 1024 * 1024
    budget = (cap * 11) // 16                    # headroom for weights / compiler scratch

    acc_bytes = 4 * max(f_int, 8) * _LANES * 4 + 2 * 8 * _LANES * 4
    y_bytes = max(f_g, 8) * hw0_pad * cache_bytes
    x1_bytes = max(f_int, 8) * hw0_pad * cache_bytes
    pc_bytes = 8 * hw0_pad * cache_bytes         # (nT, 4, TS0): 4 sublanes pad to 8
    g1_bytes = 4 * max(f_int, 8) * hw0_pad * cache_bytes

    def per_step(ts):                            # double-buffered pipeline blocks
        return 2 * (4 * f_g * ts * in_bytes + f_l * ts * in_bytes + 4 * f_g * ts * out_bytes)

    fixed = acc_bytes + y_bytes + x1_bytes + pc_bytes
    cache_g1 = fixed + g1_bytes + per_step(min(hw0_pad, 512)) <= budget
    if force_cache_g1 is not None:
        cache_g1 = bool(force_cache_g1)
    if cache_g1:
        fixed += g1_bytes

    cap_lanes = hw0_pad
    if max_lane_tile is not None:
        cap_lanes = max(_LANES, min(hw0_pad, (max_lane_tile // _LANES) * _LANES))
    ts = _LANES
    for d in range(m, 0, -1):                    # largest 128-multiple divisor that fits
        cand = _LANES * d
        if m % d == 0 and cand <= cap_lanes and fixed + per_step(cand) <= budget:
            ts = cand
            break
    needed = fixed + per_step(ts)
    vmem_limit = int(min(cap - (4 << 20), max(needed + (8 << 20), 32 << 20)))
    return hw0_pad, ts, cache_g1, vmem_limit


def attention_block_pallas(g, x0, params, *, compute_dtype=None, out_dtype=None,
                           cache_g1=None, max_lane_tile=None):
    """g: (B, F_g, H, W) NCHW, x0: (B, F_l, H/2, W/2) NCHW. Returns (B, F_g, H, W)."""
    B, F_g, H, W = g.shape
    Bx, F_l, H0, W0 = x0.shape
    assert B == Bx and H == 2 * H0 and W == 2 * W0
    F_int = params["wg"].shape[0]
    HW0 = H0 * W0
    HW = 4 * HW0

    in_dtype = compute_dtype if compute_dtype is not None else g.dtype
    cache_dtype = compute_dtype if compute_dtype is not None else jnp.float32
    if out_dtype is None:
        out_dtype = compute_dtype if compute_dtype is not None else jnp.float32

    HW0_pad, TS0, do_cache_g1, vmem_limit = _plan(
        HW0, F_g, F_l, F_int,
        in_bytes=jnp.dtype(in_dtype).itemsize,
        out_bytes=jnp.dtype(out_dtype).itemsize,
        cache_bytes=jnp.dtype(cache_dtype).itemsize,
        max_lane_tile=max_lane_tile, force_cache_g1=cache_g1)
    nT = HW0_pad // TS0

    # Pixel-shuffle g into its four 2x2-phase sub-images: (B, 4, F_g, H0*W0).
    g_ps = g.reshape(B, F_g, H0, 2, W0, 2)
    g_ps = jnp.transpose(g_ps, (0, 3, 5, 1, 2, 4)).reshape(B, 4, F_g, HW0)
    x0_f = x0.reshape(B, F_l, HW0)                       # free (contiguous) reshape
    if HW0_pad != HW0:
        pad = HW0_pad - HW0
        g_ps = jnp.pad(g_ps, ((0, 0), (0, 0), (0, 0), (0, pad)))
        x0_f = jnp.pad(x0_f, ((0, 0), (0, 0), (0, pad)))
    g_ps = g_ps.astype(in_dtype)                         # bf16 I/O halves HBM reads
    x0_f = x0_f.astype(in_dtype)

    def wcast(w):                                        # pre-cast weights; biases stay f32
        return w.astype(compute_dtype) if compute_dtype is not None else w
    wup, wg_, wx, wpsi = (wcast(params["wup"]), wcast(params["wg"]),
                          wcast(params["wx"]), wcast(params["wpsi"]))
    bup, bg_, bx, bpsi = (params["bup"], params["bg"], params["bx"], params["bpsi"])

    kernel = functools.partial(_attention_kernel, nT, TS0, HW, HW0, HW0_pad,
                               compute_dtype, _MXU_MIN_K, do_cache_g1)

    if do_cache_g1:   # g only needed in pass 0; pin p>=1 to the already-resident tile
        g_idx = lambda b, p, t: (b, 0, 0, jnp.where(p == 0, t, nT - 1))
    else:             # g re-read in pass 1; pass 2 pinned to the resident tile (no DMA)
        g_idx = lambda b, p, t: (b, 0, 0, jnp.where(p < 2, t, nT - 1))
    x0_idx = lambda b, p, t: (b, 0, jnp.where(p == 0, t, nT - 1))
    # Output only written in pass 2; the pinned block is never flushed before its rewrite.
    out_idx = lambda b, p, t: (b, 0, 0, jnp.where(p == 2, t, 0))

    def _const_spec(shape):
        return pl.BlockSpec(shape, lambda b, p, t: (0,) * len(shape))

    scratch = [
        pltpu.VMEM((F_int, _LANES), jnp.float32),    # sum(g1)   lane partials
        pltpu.VMEM((F_int, _LANES), jnp.float32),    # sum(g1^2)
        pltpu.VMEM((F_int, _LANES), jnp.float32),    # sum(x1)
        pltpu.VMEM((F_int, _LANES), jnp.float32),    # sum(x1^2)
        pltpu.VMEM((1, _LANES), jnp.float32),        # sum(psi-pre)
        pltpu.VMEM((1, _LANES), jnp.float32),        # sum(psi-pre^2)
        pltpu.VMEM((nT, 4, TS0), cache_dtype),       # psi pre-norm cache
        pltpu.VMEM((nT, F_g, TS0), cache_dtype),     # y  = Conv_up(x0) cache
        pltpu.VMEM((nT, F_int, TS0), cache_dtype),   # x1 = Conv_x(y)   cache
    ]
    if do_cache_g1:
        scratch.append(pltpu.VMEM((4 * nT, F_int, TS0), cache_dtype))   # g1 cache

    in_size = jnp.dtype(in_dtype).itemsize
    out_size = jnp.dtype(out_dtype).itemsize
    flops = 2 * B * HW0 * (F_g * F_l + F_int * F_g * (5 if do_cache_g1 else 9) + 4 * F_int)
    bytes_accessed = (B * 4 * F_g * HW0_pad * in_size * (1 if do_cache_g1 else 2)
                      + B * F_l * HW0_pad * in_size
                      + B * 4 * F_g * HW0_pad * out_size
                      + 4 * (F_g * F_l + 2 * F_int * F_g + F_int))
    cost = pl.CostEstimate(flops=int(flops), transcendentals=int(B * 4 * HW0),
                           bytes_accessed=int(bytes_accessed))

    out_ps = pl.pallas_call(
        kernel,
        out_shape=jax.ShapeDtypeStruct((B, 4, F_g, HW0_pad), out_dtype),
        grid=(B, 3, nT),
        in_specs=[
            pl.BlockSpec((None, 4, F_g, TS0), g_idx),
            pl.BlockSpec((None, F_l, TS0), x0_idx),
            _const_spec((F_g, F_l)), _const_spec((F_g, 1)),        # up conv
            _const_spec((F_int, F_g)), _const_spec((F_int, 1)),    # W_g conv
            _const_spec((F_int, F_g)), _const_spec((F_int, 1)),    # W_x conv
            _const_spec((F_int, 1)), _const_spec((1, 1)),          # psi conv
        ],
        out_specs=pl.BlockSpec((None, 4, F_g, TS0), out_idx),
        scratch_shapes=scratch,
        compiler_params=pltpu.CompilerParams(
            dimension_semantics=("parallel", "arbitrary", "arbitrary"),
            vmem_limit_bytes=vmem_limit),
        cost_estimate=cost,
    )(g_ps, x0_f, wup, bup, wg_, bg_, wx, bx, wpsi, bpsi)

    # Inverse pixel-shuffle back to NCHW (drop spatial padding first).
    out = out_ps[..., :HW0].reshape(B, 2, 2, F_g, H0, W0)
    out = jnp.transpose(out, (0, 3, 4, 1, 5, 2)).reshape(B, F_g, H, W)
    return out


def attention_block_reference(g, x0, params):
    """Pure-JAX NCHW reference of the PyTorch forward (for correctness checks)."""
    hp = jax.lax.Precision.HIGHEST

    def conv1x1(v, w, b):                      # v: NCHW, w: (Cout, Cin), b: (Cout, 1)
        return jnp.einsum("oc,bchw->bohw", w, v, precision=hp) + b.reshape(1, -1, 1, 1)

    def inorm(v):                              # per (batch, channel) over spatial, biased
        mu = jnp.mean(v, axis=(2, 3), keepdims=True)
        var = jnp.mean((v - mu) ** 2, axis=(2, 3), keepdims=True)
        return (v - mu) / jnp.sqrt(var + EPS)

    x_up = jnp.repeat(jnp.repeat(x0, 2, axis=2), 2, axis=3)
    x = conv1x1(x_up, params["wup"], params["bup"])
    g1 = inorm(conv1x1(g, params["wg"], params["bg"]))
    x1 = inorm(conv1x1(x, params["wx"], params["bx"]))
    p = jnp.maximum(g1 + x1, 0.0)
    psi = jax.nn.sigmoid(inorm(conv1x1(p, params["wpsi"].T, params["bpsi"])))
    return x * psi


def make_params(key, F_g, F_l, F_int):
    ks = jax.random.split(key, 8)
    s = 0.1
    return {
        "wup": s * jax.random.normal(ks[0], (F_g, F_l), jnp.float32),
        "bup": s * jax.random.normal(ks[1], (F_g, 1), jnp.float32),
        "wg": s * jax.random.normal(ks[2], (F_int, F_g), jnp.float32),
        "bg": s * jax.random.normal(ks[3], (F_int, 1), jnp.float32),
        "wx": s * jax.random.normal(ks[4], (F_int, F_g), jnp.float32),
        "bx": s * jax.random.normal(ks[5], (F_int, 1), jnp.float32),
        "wpsi": s * jax.random.normal(ks[6], (F_int, 1), jnp.float32),
        "bpsi": s * jax.random.normal(ks[7], (1, 1), jnp.float32),
    }


if __name__ == "__main__":
    key = jax.random.PRNGKey(0)

    # ---- test 1: small channels (VPU MAC path), spatial padding 64->128 lanes, exact f32 ----
    B, F_g, F_l, F_int, H0, W0 = 2, 8, 8, 8, 8, 8
    k1, k2, k3, key = jax.random.split(key, 4)
    g = jax.random.normal(k1, (B, F_g, 2 * H0, 2 * W0), jnp.float32)
    x0 = jax.random.normal(k2, (B, F_l, H0, W0), jnp.float32)
    params = make_params(k3, F_g, F_l, F_int)
    out = jax.block_until_ready(attention_block_pallas(g, x0, params))
    ref = attention_block_reference(g, x0, params)
    assert out.shape == (B, F_g, 2 * H0, 2 * W0)
    err = float(jnp.max(jnp.abs(out - ref)))
    assert jnp.allclose(out, ref, atol=1e-4, rtol=1e-4), f"f32 path mismatch: {err}"

    # ---- test 2: MXU path, bf16 I/O + bf16 caches + bf16 output, multi-tile, g1 cached ------
    B, F_g, F_l, F_int, H0, W0 = 2, 32, 16, 32, 16, 16
    k1, k2, k3, key = jax.random.split(key, 4)
    g = jax.random.normal(k1, (B, F_g, 2 * H0, 2 * W0), jnp.float32)
    x0 = jax.random.normal(k2, (B, F_l, H0, W0), jnp.float32)
    params = make_params(k3, F_g, F_l, F_int)
    out = jax.block_until_ready(attention_block_pallas(
        g, x0, params, compute_dtype=jnp.bfloat16, max_lane_tile=128))
    ref = attention_block_reference(g, x0, params)
    err = float(jnp.max(jnp.abs(out.astype(jnp.float32) - ref)))
    assert jnp.allclose(out.astype(jnp.float32), ref, atol=5e-2, rtol=5e-2), \
        f"bf16 cached-g1 path mismatch: {err}"

    # ---- test 3: odd spatial size (144->256 padded lanes), g1 cache disabled, bf16 ----------
    B, F_g, F_l, F_int, H0, W0 = 1, 32, 16, 32, 12, 12
    k1, k2, k3, key = jax.random.split(key, 4)
    g = jax.random.normal(k1, (B, F_g, 2 * H0, 2 * W0), jnp.float32)
    x0 = jax.random.normal(k2, (B, F_l, H0, W0), jnp.float32)
    params = make_params(k3, F_g, F_l, F_int)
    out = jax.block_until_ready(attention_block_pallas(
        g, x0, params, compute_dtype=jnp.bfloat16, cache_g1=False, max_lane_tile=128))
    ref = attention_block_reference(g, x0, params)
    err = float(jnp.max(jnp.abs(out.astype(jnp.float32) - ref)))
    assert jnp.allclose(out.astype(jnp.float32), ref, atol=5e-2, rtol=5e-2), \
        f"bf16 streaming-g path mismatch: {err}"

    print("KERNEL_OK")
</pallas_src>

<mosaic_0001>
module attributes {stable_mosaic.version = 11 : i64} {
  func.func @_attention_kernel(%arg0: i32, %arg1: i32, %arg2: i32, %arg3: memref<1x4x8x128xf32, #tpu.memory_space<vmem>>, %arg4: memref<1x8x128xf32, #tpu.memory_space<vmem>>, %arg5: memref<8x8xf32, #tpu.memory_space<vmem>>, %arg6: memref<8x1xf32, #tpu.memory_space<vmem>>, %arg7: memref<8x8xf32, #tpu.memory_space<vmem>>, %arg8: memref<8x1xf32, #tpu.memory_space<vmem>>, %arg9: memref<8x8xf32, #tpu.memory_space<vmem>>, %arg10: memref<8x1xf32, #tpu.memory_space<vmem>>, %arg11: memref<8x1xf32, #tpu.memory_space<vmem>>, %arg12: memref<1x1xf32, #tpu.memory_space<vmem>>, %arg13: memref<1x4x8x128xf32, #tpu.memory_space<vmem>>, %arg14: memref<8x128xf32, #tpu.memory_space<vmem>>, %arg15: memref<8x128xf32, #tpu.memory_space<vmem>>, %arg16: memref<8x128xf32, #tpu.memory_space<vmem>>, %arg17: memref<8x128xf32, #tpu.memory_space<vmem>>, %arg18: memref<1x128xf32, #tpu.memory_space<vmem>>, %arg19: memref<1x128xf32, #tpu.memory_space<vmem>>, %arg20: memref<1x4x128xf32, #tpu.memory_space<vmem>>, %arg21: memref<1x8x128xf32, #tpu.memory_space<vmem>>, %arg22: memref<1x8x128xf32, #tpu.memory_space<vmem>>, %arg23: memref<4x8x128xf32, #tpu.memory_space<vmem>>) attributes {dimension_semantics = [#tpu.dimension_semantics<parallel>, #tpu.dimension_semantics<arbitrary>, #tpu.dimension_semantics<arbitrary>], iteration_bounds = array<i64: 2, 3, 1>, scalar_prefetch = 0 : i64, scratch_operands = 10 : i64, tpu.core_type = #tpu.core_type<tc>, window_params = [{transform_indices = @transform_0, window_bounds = array<i64: 1, 4, 8, 128>}, {transform_indices = @transform_1, window_bounds = array<i64: 1, 8, 128>}, {pipeline_mode = #tpu.pipeline_mode<synchronous>, transform_indices = @transform_2, window_bounds = array<i64: 8, 8>}, {pipeline_mode = #tpu.pipeline_mode<synchronous>, transform_indices = @transform_3, window_bounds = array<i64: 8, 1>}, {pipeline_mode = #tpu.pipeline_mode<synchronous>, transform_indices = @transform_4, window_bounds = array<i64: 8, 8>}, {pipeline_mode = #tpu.pipeline_mode<synchronous>, transform_indices = @transform_5, window_bounds = array<i64: 8, 1>}, {pipeline_mode = #tpu.pipeline_mode<synchronous>, transform_indices = @transform_6, window_bounds = array<i64: 8, 8>}, {pipeline_mode = #tpu.pipeline_mode<synchronous>, transform_indices = @transform_7, window_bounds = array<i64: 8, 1>}, {pipeline_mode = #tpu.pipeline_mode<synchronous>, transform_indices = @transform_8, window_bounds = array<i64: 8, 1>}, {pipeline_mode = #tpu.pipeline_mode<synchronous>, transform_indices = @transform_9, window_bounds = array<i64: 1, 1>}, {transform_indices = @transform_10, window_bounds = array<i64: 1, 4, 8, 128>}]} {
    %0 = tpu.iota {dimensions = array<i32: 1>} : vector<1x128xi32>
    %c128_i32 = arith.constant 128 : i32
    %1 = arith.muli %arg2, %c128_i32 : i32
    %2 = vector.broadcast %1 : i32 to vector<1x128xi32>
    %3 = arith.addi %2, %0 : vector<1x128xi32>
    %c64_i32 = arith.constant 64 : i32
    %4 = vector.broadcast %c64_i32 : i32 to vector<1x128xi32>
    %5 = arith.cmpi slt, %3, %4 : vector<1x128xi32>
    %6 = arith.extui %5 : vector<1x128xi1> to vector<1x128xi32>
    %7 = arith.sitofp %6 : vector<1x128xi32> to vector<1x128xf32>
    %c0_i32 = arith.constant 0 : i32
    %8 = arith.cmpi eq, %arg1, %c0_i32 : i32
    %c0_i32_0 = arith.constant 0 : i32
    %9 = arith.cmpi eq, %arg2, %c0_i32_0 : i32
    %10 = arith.andi %8, %9 : i1
    %11 = arith.extui %10 : i1 to i32
    %c0_i32_1 = arith.constant 0 : i32
    %12 = arith.cmpi ne, %11, %c0_i32_1 : i32
    scf.if %12 {
      %cst = arith.constant 0.000000e+00 : f32
      %22 = vector.broadcast %cst : f32 to vector<8x128xf32>
      %c0 = arith.constant 0 : index
      %c0_6 = arith.constant 0 : index
      %23 = vector.load %arg14[%c0, %c0_6] : memref<8x128xf32, #tpu.memory_space<vmem>>, vector<8x128xf32>
      tpu.vector_store %arg14[%c0, %c0_6], %22 {strides = array<i32>} : memref<8x128xf32, #tpu.memory_space<vmem>>, vector<8x128xf32>,
      %cst_7 = arith.constant 0.000000e+00 : f32
      %24 = vector.broadcast %cst_7 : f32 to vector<8x128xf32>
      %c0_8 = arith.constant 0 : index
      %c0_9 = arith.constant 0 : index
      %25 = vector.load %arg15[%c0_8, %c0_9] : memref<8x128xf32, #tpu.memory_space<vmem>>, vector<8x128xf32>
      tpu.vector_store %arg15[%c0_8, %c0_9], %24 {strides = array<i32>} : memref<8x128xf32, #tpu.memory_space<vmem>>, vector<8x128xf32>,
      %cst_10 = arith.constant 0.000000e+00 : f32
      %26 = vector.broadcast %cst_10 : f32 to vector<8x128xf32>
      %c0_11 = arith.constant 0 : index
      %c0_12 = arith.constant 0 : index
      %27 = vector.load %arg16[%c0_11, %c0_12] : memref<8x128xf32, #tpu.memory_space<vmem>>, vector<8x128xf32>
      tpu.vector_store %arg16[%c0_11, %c0_12], %26 {strides = array<i32>} : memref<8x128xf32, #tpu.memory_space<vmem>>, vector<8x128xf32>,
      %cst_13 = arith.constant 0.000000e+00 : f32
      %28 = vector.broadcast %cst_13 : f32 to vector<8x128xf32>
      %c0_14 = arith.constant 0 : index
      %c0_15 = arith.constant 0 : index
      %29 = vector.load %arg17[%c0_14, %c0_15] : memref<8x128xf32, #tpu.memory_space<vmem>>, vector<8x128xf32>
      tpu.vector_store %arg17[%c0_14, %c0_15], %28 {strides = array<i32>} : memref<8x128xf32, #tpu.memory_space<vmem>>, vector<8x128xf32>,
      %cst_16 = arith.constant 0.000000e+00 : f32
      %30 = vector.broadcast %cst_16 : f32 to vector<1x128xf32>
      %c0_17 = arith.constant 0 : index
      %c0_18 = arith.constant 0 : index
      %31 = vector.load %arg18[%c0_17, %c0_18] : memref<1x128xf32, #tpu.memory_space<vmem>>, vector<1x128xf32>
      tpu.vector_store %arg18[%c0_17, %c0_18], %30 {strides = array<i32>} : memref<1x128xf32, #tpu.memory_space<vmem>>, vector<1x128xf32>,
      %cst_19 = arith.constant 0.000000e+00 : f32
      %32 = vector.broadcast %cst_19 : f32 to vector<1x128xf32>
      %c0_20 = arith.constant 0 : index
      %c0_21 = arith.constant 0 : index
      %33 = vector.load %arg19[%c0_20, %c0_21] : memref<1x128xf32, #tpu.memory_space<vmem>>, vector<1x128xf32>
      tpu.vector_store %arg19[%c0_20, %c0_21], %32 {strides = array<i32>} : memref<1x128xf32, #tpu.memory_space<vmem>>, vector<1x128xf32>,
    } else {
    }
    %c0_i32_2 = arith.constant 0 : i32
    %13 = arith.cmpi eq, %arg1, %c0_i32_2 : i32
    %14 = arith.extui %13 : i1 to i32
    %c0_i32_3 = arith.constant 0 : i32
    %15 = arith.cmpi ne, %14, %c0_i32_3 : i32
    scf.if %15 {
      %c0 = arith.constant 0 : index
      %c0_6 = arith.constant 0 : index
      %c0_7 = arith.constant 0 : index
      %22 = vector.load %arg4[%c0, %c0_6, %c0_7] : memref<1x8x128xf32, #tpu.memory_space<vmem>>, vector<1x8x128xf32>
      %23 = vector.shape_cast %22 : vector<1x8x128xf32> to vector<8x128xf32>
      %c0_8 = arith.constant 0 : index
      %c0_9 = arith.constant 0 : index
      %24 = vector.load %arg5[%c0_8, %c0_9] : memref<8x8xf32, #tpu.memory_space<vmem>>, vector<8x8xf32>
      %25 = vector.extract_strided_slice %24 {offsets = [0, 0], sizes = [8, 1], strides = [1, 1]} : vector<8x8xf32> to vector<8x1xf32>
      %26 = vector.extract_strided_slice %23 {offsets = [0, 0], sizes = [1, 128], strides = [1, 1]} : vector<8x128xf32> to vector<1x128xf32>
      %27 = vector.broadcast %25 : vector<8x1xf32> to vector<8x128xf32>
      %28 = vector.broadcast %26 : vector<1x128xf32> to vector<8x128xf32>
      %29 = arith.mulf %27, %28 : vector<8x128xf32>
      %30 = vector.extract_strided_slice %24 {offsets = [0, 1], sizes = [8, 1], strides = [1, 1]} : vector<8x8xf32> to vector<8x1xf32>
      %31 = vector.extract_strided_slice %23 {offsets = [1, 0], sizes = [1, 128], strides = [1, 1]} : vector<8x128xf32> to vector<1x128xf32>
      %32 = vector.broadcast %30 : vector<8x1xf32> to vector<8x128xf32>
      %33 = vector.broadcast %31 : vector<1x128xf32> to vector<8x128xf32>
      %34 = arith.mulf %32, %33 : vector<8x128xf32>
      %35 = arith.addf %29, %34 : vector<8x128xf32>
      %36 = vector.extract_strided_slice %24 {offsets = [0, 2], sizes = [8, 1], strides = [1, 1]} : vector<8x8xf32> to vector<8x1xf32>
      %37 = vector.extract_strided_slice %23 {offsets = [2, 0], sizes = [1, 128], strides = [1, 1]} : vector<8x128xf32> to vector<1x128xf32>
      %38 = vector.broadcast %36 : vector<8x1xf32> to vector<8x128xf32>
      %39 = vector.broadcast %37 : vector<1x128xf32> to vector<8x128xf32>
      %40 = arith.mulf %38, %39 : vector<8x128xf32>
      %41 = arith.addf %35, %40 : vector<8x128xf32>
      %42 = vector.extract_strided_slice %24 {offsets = [0, 3], sizes = [8, 1], strides = [1, 1]} : vector<8x8xf32> to vector<8x1xf32>
      %43 = vector.extract_strided_slice %23 {offsets = [3, 0], sizes = [1, 128], strides = [1, 1]} : vector<8x128xf32> to vector<1x128xf32>
      %44 = vector.broadcast %42 : vector<8x1xf32> to vector<8x128xf32>
      %45 = vector.broadcast %43 : vector<1x128xf32> to vector<8x128xf32>
      %46 = arith.mulf %44, %45 : vector<8x128xf32>
      %47 = arith.addf %41, %46 : vector<8x128xf32>
      %48 = vector.extract_strided_slice %24 {offsets = [0, 4], sizes = [8, 1], strides = [1, 1]} : vector<8x8xf32> to vector<8x1xf32>
      %49 = vector.extract_strided_slice %23 {offsets = [4, 0], sizes = [1, 128], strides = [1, 1]} : vector<8x128xf32> to vector<1x128xf32>
      %50 = vector.broadcast %48 : vector<8x1xf32> to vector<8x128xf32>
      %51 = vector.broadcast %49 : vector<1x128xf32> to vector<8x128xf32>
      %52 = arith.mulf %50, %51 : vector<8x128xf32>
      %53 = arith.addf %47, %52 : vector<8x128xf32>
      %54 = vector.extract_strided_slice %24 {offsets = [0, 5], sizes = [8, 1], strides = [1, 1]} : vector<8x8xf32> to vector<8x1xf32>
      %55 = vector.extract_strided_slice %23 {offsets = [5, 0], sizes = [1, 128], strides = [1, 1]} : vector<8x128xf32> to vector<1x128xf32>
      %56 = vector.broadcast %54 : vector<8x1xf32> to vector<8x128xf32>
      %57 = vector.broadcast %55 : vector<1x128xf32> to vector<8x128xf32>
      %58 = arith.mulf %56, %57 : vector<8x128xf32>
      %59 = arith.addf %53, %58 : vector<8x128xf32>
      %60 = vector.extract_strided_slice %24 {offsets = [0, 6], sizes = [8, 1], strides = [1, 1]} : vector<8x8xf32> to vector<8x1xf32>
      %61 = vector.extract_strided_slice %23 {offsets = [6, 0], sizes = [1, 128], strides = [1, 1]} : vector<8x128xf32> to vector<1x128xf32>
      %62 = vector.broadcast %60 : vector<8x1xf32> to vector<8x128xf32>
      %63 = vector.broadcast %61 : vector<1x128xf32> to vector<8x128xf32>
      %64 = arith.mulf %62, %63 : vector<8x128xf32>
      %65 = arith.addf %59, %64 : vector<8x128xf32>
      %66 = vector.extract_strided_slice %24 {offsets = [0, 7], sizes = [8, 1], strides = [1, 1]} : vector<8x8xf32> to vector<8x1xf32>
      %67 = vector.extract_strided_slice %23 {offsets = [7, 0], sizes = [1, 128], strides = [1, 1]} : vector<8x128xf32> to vector<1x128xf32>
      %68 = vector.broadcast %66 : vector<8x1xf32> to vector<8x128xf32>
      %69 = vector.broadcast %67 : vector<1x128xf32> to vector<8x128xf32>
      %70 = arith.mulf %68, %69 : vector<8x128xf32>
      %71 = arith.addf %65, %70 : vector<8x128xf32>
      %c0_10 = arith.constant 0 : index
      %c0_11 = arith.constant 0 : index
      %72 = vector.load %arg6[%c0_10, %c0_11] : memref<8x1xf32, #tpu.memory_space<vmem>>, vector<8x1xf32>
      %73 = vector.broadcast %72 : vector<8x1xf32> to vector<8x128xf32>
      %74 = arith.addf %71, %73 : vector<8x128xf32>
      %c0_12 = arith.constant 0 : index
      %c0_13 = arith.constant 0 : index
      %75 = vector.load %arg9[%c0_12, %c0_13] : memref<8x8xf32, #tpu.memory_space<vmem>>, vector<8x8xf32>
      %76 = vector.extract_strided_slice %75 {offsets = [0, 0], sizes = [8, 1], strides = [1, 1]} : vector<8x8xf32> to vector<8x1xf32>
      %77 = vector.extract_strided_slice %74 {offsets = [0, 0], sizes = [1, 128], strides = [1, 1]} : vector<8x128xf32> to vector<1x128xf32>
      %78 = vector.broadcast %76 : vector<8x1xf32> to vector<8x128xf32>
      %79 = vector.broadcast %77 : vector<1x128xf32> to vector<8x128xf32>
      %80 = arith.mulf %78, %79 : vector<8x128xf32>
      %81 = vector.extract_strided_slice %75 {offsets = [0, 1], sizes = [8, 1], strides = [1, 1]} : vector<8x8xf32> to vector<8x1xf32>
      %82 = vector.extract_strided_slice %74 {offsets = [1, 0], sizes = [1, 128], strides = [1, 1]} : vector<8x128xf32> to vector<1x128xf32>
      %83 = vector.broadcast %81 : vector<8x1xf32> to vector<8x128xf32>
      %84 = vector.broadcast %82 : vector<1x128xf32> to vector<8x128xf32>
      %85 = arith.mulf %83, %84 : vector<8x128xf32>
      %86 = arith.addf %80, %85 : vector<8x128xf32>
      %87 = vector.extract_strided_slice %75 {offsets = [0, 2], sizes = [8, 1], strides = [1, 1]} : vector<8x8xf32> to vector<8x1xf32>
      %88 = vector.extract_strided_slice %74 {offsets = [2, 0], sizes = [1, 128], strides = [1, 1]} : vector<8x128xf32> to vector<1x128xf32>
      %89 = vector.broadcast %87 : vector<8x1xf32> to vector<8x128xf32>
      %90 = vector.broadcast %88 : vector<1x128xf32> to vector<8x128xf32>
      %91 = arith.mulf %89, %90 : vector<8x128xf32>
      %92 = arith.addf %86, %91 : vector<8x128xf32>
      %93 = vector.extract_strided_slice %75 {offsets = [0, 3], sizes = [8, 1], strides = [1, 1]} : vector<8x8xf32> to vector<8x1xf32>
      %94 = vector.extract_strided_slice %74 {offsets = [3, 0], sizes = [1, 128], strides = [1, 1]} : vector<8x128xf32> to vector<1x128xf32>
      %95 = vector.broadcast %93 : vector<8x1xf32> to vector<8x128xf32>
      %96 = vector.broadcast %94 : vector<1x128xf32> to vector<8x128xf32>
      %97 = arith.mulf %95, %96 : vector<8x128xf32>
      %98 = arith.addf %92, %97 : vector<8x128xf32>
      %99 = vector.extract_strided_slice %75 {offsets = [0, 4], sizes = [8, 1], strides = [1, 1]} : vector<8x8xf32> to vector<8x1xf32>
      %100 = vector.extract_strided_slice %74 {offsets = [4, 0], sizes = [1, 128], strides = [1, 1]} : vector<8x128xf32> to vector<1x128xf32>
      %101 = vector.broadcast %99 : vector<8x1xf32> to vector<8x128xf32>
      %102 = vector.broadcast %100 : vector<1x128xf32> to vector<8x128xf32>
      %103 = arith.mulf %101, %102 : vector<8x128xf32>
      %104 = arith.addf %98, %103 : vector<8x128xf32>
      %105 = vector.extract_strided_slice %75 {offsets = [0, 5], sizes = [8, 1], strides = [1, 1]} : vector<8x8xf32> to vector<8x1xf32>
      %106 = vector.extract_strided_slice %74 {offsets = [5, 0], sizes = [1, 128], strides = [1, 1]} : vector<8x128xf32> to vector<1x128xf32>
      %107 = vector.broadcast %105 : vector<8x1xf32> to vector<8x128xf32>
      %108 = vector.broadcast %106 : vector<1x128xf32> to vector<8x128xf32>
      %109 = arith.mulf %107, %108 : vector<8x128xf32>
      %110 = arith.addf %104, %109 : vector<8x128xf32>
      %111 = vector.extract_strided_slice %75 {offsets = [0, 6], sizes = [8, 1], strides = [1, 1]} : vector<8x8xf32> to vector<8x1xf32>
      %112 = vector.extract_strided_slice %74 {offsets = [6, 0], sizes = [1, 128], strides = [1, 1]} : vector<8x128xf32> to vector<1x128xf32>
      %113 = vector.broadcast %111 : vector<8x1xf32> to vector<8x128xf32>
      %114 = vector.broadcast %112 : vector<1x128xf32> to vector<8x128xf32>
      %115 = arith.mulf %113, %114 : vector<8x128xf32>
      %116 = arith.addf %110, %115 : vector<8x128xf32>
      %117 = vector.extract_strided_slice %75 {offsets = [0, 7], sizes = [8, 1], strides = [1, 1]} : vector<8x8xf32> to vector<8x1xf32>
      %118 = vector.extract_strided_slice %74 {offsets = [7, 0], sizes = [1, 128], strides = [1, 1]} : vector<8x128xf32> to vector<1x128xf32>
      %119 = vector.broadcast %117 : vector<8x1xf32> to vector<8x128xf32>
      %120 = vector.broadcast %118 : vector<1x128xf32> to vector<8x128xf32>
      %121 = arith.mulf %119, %120 : vector<8x128xf32>
      %122 = arith.addf %116, %121 : vector<8x128xf32>
      %c0_14 = arith.constant 0 : index
      %c0_15 = arith.constant 0 : index
      %123 = vector.load %arg10[%c0_14, %c0_15] : memref<8x1xf32, #tpu.memory_space<vmem>>, vector<8x1xf32>
      %124 = vector.broadcast %123 : vector<8x1xf32> to vector<8x128xf32>
      %125 = arith.addf %122, %124 : vector<8x128xf32>
      %126 = arith.index_cast %arg2 : i32 to index
      %c0_16 = arith.constant 0 : index
      %c0_17 = arith.constant 0 : index
      %127 = vector.load %arg21[%126, %c0_16, %c0_17] : memref<1x8x128xf32, #tpu.memory_space<vmem>>, vector<1x8x128xf32>
      %128 = vector.shape_cast %127 : vector<1x8x128xf32> to vector<8x128xf32>
      %129 = vector.shape_cast %74 : vector<8x128xf32> to vector<1x8x128xf32>
      tpu.vector_store %arg21[%126, %c0_16, %c0_17], %129 {strides = array<i32>} : memref<1x8x128xf32, #tpu.memory_space<vmem>>, vector<1x8x128xf32>,
      %130 = arith.index_cast %arg2 : i32 to index
      %c0_18 = arith.constant 0 : index
      %c0_19 = arith.constant 0 : index
      %131 = vector.load %arg22[%130, %c0_18, %c0_19] : memref<1x8x128xf32, #tpu.memory_space<vmem>>, vector<1x8x128xf32>
      %132 = vector.shape_cast %131 : vector<1x8x128xf32> to vector<8x128xf32>
      %133 = vector.shape_cast %125 : vector<8x128xf32> to vector<1x8x128xf32>
      tpu.vector_store %arg22[%130, %c0_18, %c0_19], %133 {strides = array<i32>} : memref<1x8x128xf32, #tpu.memory_space<vmem>>, vector<1x8x128xf32>,
      %134 = vector.broadcast %7 : vector<1x128xf32> to vector<8x128xf32>
      %135 = arith.mulf %125, %134 : vector<8x128xf32>
      %c0_20 = arith.constant 0 : index
      %c0_21 = arith.constant 0 : index
      %136 = vector.load %arg16[%c0_20, %c0_21] : memref<8x128xf32, #tpu.memory_space<vmem>>, vector<8x128xf32>
      %137 = arith.addf %136, %135 : vector<8x128xf32>
      %c0_22 = arith.constant 0 : index
      %c0_23 = arith.constant 0 : index
      %138 = vector.load %arg16[%c0_22, %c0_23] : memref<8x128xf32, #tpu.memory_space<vmem>>, vector<8x128xf32>
      tpu.vector_store %arg16[%c0_22, %c0_23], %137 {strides = array<i32>} : memref<8x128xf32, #tpu.memory_space<vmem>>, vector<8x128xf32>,
      %139 = arith.mulf %135, %135 : vector<8x128xf32>
      %c0_24 = arith.constant 0 : index
      %c0_25 = arith.constant 0 : index
      %140 = vector.load %arg17[%c0_24, %c0_25] : memref<8x128xf32, #tpu.memory_space<vmem>>, vector<8x128xf32>
      %141 = arith.addf %140, %139 : vector<8x128xf32>
      %c0_26 = arith.constant 0 : index
      %c0_27 = arith.constant 0 : index
      %142 = vector.load %arg17[%c0_26, %c0_27] : memref<8x128xf32, #tpu.memory_space<vmem>>, vector<8x128xf32>
      tpu.vector_store %arg17[%c0_26, %c0_27], %141 {strides = array<i32>} : memref<8x128xf32, #tpu.memory_space<vmem>>, vector<8x128xf32>,
      %c0_i32_28 = arith.constant 0 : i32
      %c4_i32 = arith.constant 4 : i32
      %143 = arith.addi %c0_i32_28, %c4_i32 : i32
      %c1_i32_29 = arith.constant 1 : i32
      scf.for %arg24 = %c0_i32_28 to %143 step %c1_i32_29  : i32 {
        %c0_31 = arith.constant 0 : index
        %144 = arith.index_cast %arg24 : i32 to index
        %c0_32 = arith.constant 0 : index
        %c0_33 = arith.constant 0 : index
        %145 = vector.load %arg3[%c0_31, %144, %c0_32, %c0_33] : memref<1x4x8x128xf32, #tpu.memory_space<vmem>>, vector<1x1x8x128xf32>
        %146 = vector.shape_cast %145 : vector<1x1x8x128xf32> to vector<8x128xf32>
        %c0_34 = arith.constant 0 : index
        %c0_35 = arith.constant 0 : index
        %147 = vector.load %arg7[%c0_34, %c0_35] : memref<8x8xf32, #tpu.memory_space<vmem>>, vector<8x8xf32>
        %148 = vector.extract_strided_slice %147 {offsets = [0, 0], sizes = [8, 1], strides = [1, 1]} : vector<8x8xf32> to vector<8x1xf32>
        %149 = vector.extract_strided_slice %146 {offsets = [0, 0], sizes = [1, 128], strides = [1, 1]} : vector<8x128xf32> to vector<1x128xf32>
        %150 = vector.broadcast %148 : vector<8x1xf32> to vector<8x128xf32>
        %151 = vector.broadcast %149 : vector<1x128xf32> to vector<8x128xf32>
        %152 = arith.mulf %150, %151 : vector<8x128xf32>
        %153 = vector.extract_strided_slice %147 {offsets = [0, 1], sizes = [8, 1], strides = [1, 1]} : vector<8x8xf32> to vector<8x1xf32>
        %154 = vector.extract_strided_slice %146 {offsets = [1, 0], sizes = [1, 128], strides = [1, 1]} : vector<8x128xf32> to vector<1x128xf32>
        %155 = vector.broadcast %153 : vector<8x1xf32> to vector<8x128xf32>
        %156 = vector.broadcast %154 : vector<1x128xf32> to vector<8x128xf32>
        %157 = arith.mulf %155, %156 : vector<8x128xf32>
        %158 = arith.addf %152, %157 : vector<8x128xf32>
        %159 = vector.extract_strided_slice %147 {offsets = [0, 2], sizes = [8, 1], strides = [1, 1]} : vector<8x8xf32> to vector<8x1xf32>
        %160 = vector.extract_strided_slice %146 {offsets = [2, 0], sizes = [1, 128], strides = [1, 1]} : vector<8x128xf32> to vector<1x128xf32>
        %161 = vector.broadcast %159 : vector<8x1xf32> to vector<8x128xf32>
        %162 = vector.broadcast %160 : vector<1x128xf32> to vector<8x128xf32>
        %163 = arith.mulf %161, %162 : vector<8x128xf32>
        %164 = arith.addf %158, %163 : vector<8x128xf32>
        %165 = vector.extract_strided_slice %147 {offsets = [0, 3], sizes = [8, 1], strides = [1, 1]} : vector<8x8xf32> to vector<8x1xf32>
        %166 = vector.extract_strided_slice %146 {offsets = [3, 0], sizes = [1, 128], strides = [1, 1]} : vector<8x128xf32> to vector<1x128xf32>
        %167 = vector.broadcast %165 : vector<8x1xf32> to vector<8x128xf32>
        %168 = vector.broadcast %166 : vector<1x128xf32> to vector<8x128xf32>
        %169 = arith.mulf %167, %168 : vector<8x128xf32>
        %170 = arith.addf %164, %169 : vector<8x128xf32>
        %171 = vector.extract_strided_slice %147 {offsets = [0, 4], sizes = [8, 1], strides = [1, 1]} : vector<8x8xf32> to vector<8x1xf32>
        %172 = vector.extract_strided_slice %146 {offsets = [4, 0], sizes = [1, 128], strides = [1, 1]} : vector<8x128xf32> to vector<1x128xf32>
        %173 = vector.broadcast %171 : vector<8x1xf32> to vector<8x128xf32>
        %174 = vector.broadcast %172 : vector<1x128xf32> to vector<8x128xf32>
        %175 = arith.mulf %173, %174 : vector<8x128xf32>
        %176 = arith.addf %170, %175 : vector<8x128xf32>
        %177 = vector.extract_strided_slice %147 {offsets = [0, 5], sizes = [8, 1], strides = [1, 1]} : vector<8x8xf32> to vector<8x1xf32>
        %178 = vector.extract_strided_slice %146 {offsets = [5, 0], sizes = [1, 128], strides = [1, 1]} : vector<8x128xf32> to vector<1x128xf32>
        %179 = vector.broadcast %177 : vector<8x1xf32> to vector<8x128xf32>
        %180 = vector.broadcast %178 : vector<1x128xf32> to vector<8x128xf32>
        %181 = arith.mulf %179, %180 : vector<8x128xf32>
        %182 = arith.addf %176, %181 : vector<8x128xf32>
        %183 = vector.extract_strided_slice %147 {offsets = [0, 6], sizes = [8, 1], strides = [1, 1]} : vector<8x8xf32> to vector<8x1xf32>
        %184 = vector.extract_strided_slice %146 {offsets = [6, 0], sizes = [1, 128], strides = [1, 1]} : vector<8x128xf32> to vector<1x128xf32>
        %185 = vector.broadcast %183 : vector<8x1xf32> to vector<8x128xf32>
        %186 = vector.broadcast %184 : vector<1x128xf32> to vector<8x128xf32>
        %187 = arith.mulf %185, %186 : vector<8x128xf32>
        %188 = arith.addf %182, %187 : vector<8x128xf32>
        %189 = vector.extract_strided_slice %147 {offsets = [0, 7], sizes = [8, 1], strides = [1, 1]} : vector<8x8xf32> to vector<8x1xf32>
        %190 = vector.extract_strided_slice %146 {offsets = [7, 0], sizes = [1, 128], strides = [1, 1]} : vector<8x128xf32> to vector<1x128xf32>
        %191 = vector.broadcast %189 : vector<8x1xf32> to vector<8x128xf32>
        %192 = vector.broadcast %190 : vector<1x128xf32> to vector<8x128xf32>
        %193 = arith.mulf %191, %192 : vector<8x128xf32>
        %194 = arith.addf %188, %193 : vector<8x128xf32>
        %c0_36 = arith.constant 0 : index
        %c0_37 = arith.constant 0 : index
        %195 = vector.load %arg8[%c0_36, %c0_37] : memref<8x1xf32, #tpu.memory_space<vmem>>, vector<8x1xf32>
        %196 = vector.broadcast %195 : vector<8x1xf32> to vector<8x128xf32>
        %197 = arith.addf %194, %196 : vector<8x128xf32>
        %c1_i32_38 = arith.constant 1 : i32
        %198 = arith.muli %arg24, %c1_i32_38 : i32
        %199 = arith.addi %198, %arg2 : i32
        %200 = arith.index_cast %199 : i32 to index
        %c0_39 = arith.constant 0 : index
        %c0_40 = arith.constant 0 : index
        %201 = vector.load %arg23[%200, %c0_39, %c0_40] : memref<4x8x128xf32, #tpu.memory_space<vmem>>, vector<1x8x128xf32>
        %202 = vector.shape_cast %201 : vector<1x8x128xf32> to vector<8x128xf32>
        %203 = vector.shape_cast %197 : vector<8x128xf32> to vector<1x8x128xf32>
        tpu.vector_store %arg23[%200, %c0_39, %c0_40], %203 {strides = array<i32>} : memref<4x8x128xf32, #tpu.memory_space<vmem>>, vector<1x8x128xf32>,
        %204 = vector.broadcast %7 : vector<1x128xf32> to vector<8x128xf32>
        %205 = arith.mulf %197, %204 : vector<8x128xf32>
        %c0_41 = arith.constant 0 : index
        %c0_42 = arith.constant 0 : index
        %206 = vector.load %arg14[%c0_41, %c0_42] : memref<8x128xf32, #tpu.memory_space<vmem>>, vector<8x128xf32>
        %207 = arith.addf %206, %205 : vector<8x128xf32>
        %c0_43 = arith.constant 0 : index
        %c0_44 = arith.constant 0 : index
        %208 = vector.load %arg14[%c0_43, %c0_44] : memref<8x128xf32, #tpu.memory_space<vmem>>, vector<8x128xf32>
        tpu.vector_store %arg14[%c0_43, %c0_44], %207 {strides = array<i32>} : memref<8x128xf32, #tpu.memory_space<vmem>>, vector<8x128xf32>,
        %209 = arith.mulf %205, %205 : vector<8x128xf32>
        %c0_45 = arith.constant 0 : index
        %c0_46 = arith.constant 0 : index
        %210 = vector.load %arg15[%c0_45, %c0_46] : memref<8x128xf32, #tpu.memory_space<vmem>>, vector<8x128xf32>
        %211 = arith.addf %210, %209 : vector<8x128xf32>
        %c0_47 = arith.constant 0 : index
        %c0_48 = arith.constant 0 : index
        %212 = vector.load %arg15[%c0_47, %c0_48] : memref<8x128xf32, #tpu.memory_space<vmem>>, vector<8x128xf32>
        tpu.vector_store %arg15[%c0_47, %c0_48], %211 {strides = array<i32>} : memref<8x128xf32, #tpu.memory_space<vmem>>, vector<8x128xf32>,
      }
      %c4_i32_30 = arith.constant 4 : i32
    } else {
    }
    %c1_i32 = arith.constant 1 : i32
    %16 = arith.cmpi eq, %arg1, %c1_i32 : i32
    %17 = arith.extui %16 : i1 to i32
    %c0_i32_4 = arith.constant 0 : i32
    %18 = arith.cmpi ne, %17, %c0_i32_4 : i32
    scf.if %18 {
      %c0 = arith.constant 0 : index
      %c0_6 = arith.constant 0 : index
      %22 = vector.load %arg14[%c0, %c0_6] : memref<8x128xf32, #tpu.memory_space<vmem>>, vector<8x128xf32>
      %cst = arith.constant dense<0.000000e+00> : vector<8xf32>
      %23 = vector.multi_reduction <add>, %22, %cst [1] : vector<8x128xf32> to vector<8xf32>
      %24 = vector.shape_cast %23 : vector<8xf32> to vector<8x1xf32>
      %cst_7 = arith.constant 3.906250e-03 : f32
      %25 = vector.broadcast %cst_7 : f32 to vector<8x1xf32>
      %26 = arith.mulf %24, %25 : vector<8x1xf32>
      %c0_8 = arith.constant 0 : index
      %c0_9 = arith.constant 0 : index
      %27 = vector.load %arg15[%c0_8, %c0_9] : memref<8x128xf32, #tpu.memory_space<vmem>>, vector<8x128xf32>
      %cst_10 = arith.constant dense<0.000000e+00> : vector<8xf32>
      %28 = vector.multi_reduction <add>, %27, %cst_10 [1] : vector<8x128xf32> to vector<8xf32>
      %29 = vector.shape_cast %28 : vector<8xf32> to vector<8x1xf32>
      %cst_11 = arith.constant 3.906250e-03 : f32
      %30 = vector.broadcast %cst_11 : f32 to vector<8x1xf32>
      %31 = arith.mulf %29, %30 : vector<8x1xf32>
      %32 = arith.mulf %26, %26 : vector<8x1xf32>
      %33 = arith.subf %31, %32 : vector<8x1xf32>
      %cst_12 = arith.constant 0.000000e+00 : f32
      %34 = vector.broadcast %cst_12 : f32 to vector<8x1xf32>
      %35 = arith.maximumf %33, %34 : vector<8x1xf32>
      %cst_13 = arith.constant 9.99999974E-6 : f32
      %36 = vector.broadcast %cst_13 : f32 to vector<8x1xf32>
      %37 = arith.addf %35, %36 : vector<8x1xf32>
      %38 = math.rsqrt %37 : vector<8x1xf32>
      %c0_14 = arith.constant 0 : index
      %c0_15 = arith.constant 0 : index
      %39 = vector.load %arg16[%c0_14, %c0_15] : memref<8x128xf32, #tpu.memory_space<vmem>>, vector<8x128xf32>
      %cst_16 = arith.constant dense<0.000000e+00> : vector<8xf32>
      %40 = vector.multi_reduction <add>, %39, %cst_16 [1] : vector<8x128xf32> to vector<8xf32>
      %41 = vector.shape_cast %40 : vector<8xf32> to vector<8x1xf32>
      %cst_17 = arith.constant 1.562500e-02 : f32
      %42 = vector.broadcast %cst_17 : f32 to vector<8x1xf32>
      %43 = arith.mulf %41, %42 : vector<8x1xf32>
      %c0_18 = arith.constant 0 : index
      %c0_19 = arith.constant 0 : index
      %44 = vector.load %arg17[%c0_18, %c0_19] : memref<8x128xf32, #tpu.memory_space<vmem>>, vector<8x128xf32>
      %cst_20 = arith.constant dense<0.000000e+00> : vector<8xf32>
      %45 = vector.multi_reduction <add>, %44, %cst_20 [1] : vector<8x128xf32> to vector<8xf32>
      %46 = vector.shape_cast %45 : vector<8xf32> to vector<8x1xf32>
      %cst_21 = arith.constant 1.562500e-02 : f32
      %47 = vector.broadcast %cst_21 : f32 to vector<8x1xf32>
      %48 = arith.mulf %46, %47 : vector<8x1xf32>
      %49 = arith.mulf %43, %43 : vector<8x1xf32>
      %50 = arith.subf %48, %49 : vector<8x1xf32>
      %cst_22 = arith.constant 0.000000e+00 : f32
      %51 = vector.broadcast %cst_22 : f32 to vector<8x1xf32>
      %52 = arith.maximumf %50, %51 : vector<8x1xf32>
      %cst_23 = arith.constant 9.99999974E-6 : f32
      %53 = vector.broadcast %cst_23 : f32 to vector<8x1xf32>
      %54 = arith.addf %52, %53 : vector<8x1xf32>
      %55 = math.rsqrt %54 : vector<8x1xf32>
      %56 = arith.index_cast %arg2 : i32 to index
      %c0_24 = arith.constant 0 : index
      %c0_25 = arith.constant 0 : index
      %57 = vector.load %arg22[%56, %c0_24, %c0_25] : memref<1x8x128xf32, #tpu.memory_space<vmem>>, vector<1x8x128xf32>
      %58 = vector.shape_cast %57 : vector<1x8x128xf32> to vector<8x128xf32>
      %59 = vector.broadcast %43 : vector<8x1xf32> to vector<8x128xf32>
      %60 = arith.subf %58, %59 : vector<8x128xf32>
      %61 = vector.broadcast %55 : vector<8x1xf32> to vector<8x128xf32>
      %62 = arith.mulf %60, %61 : vector<8x128xf32>
      %c0_26 = arith.constant 0 : index
      %c0_27 = arith.constant 0 : index
      %63 = vector.load %arg11[%c0_26, %c0_27] : memref<8x1xf32, #tpu.memory_space<vmem>>, vector<8x1xf32>
      %c0_28 = arith.constant 0 : index
      %c0_29 = arith.constant 0 : index
      %64 = vector.load %arg12[%c0_28, %c0_29] : memref<1x1xf32, #tpu.memory_space<vmem>>, vector<1x1xf32>
      %c0_i32_30 = arith.constant 0 : i32
      %65 = arith.addi %c0_i32_30, %arg2 : i32
      %66 = arith.index_cast %65 : i32 to index
      %c0_31 = arith.constant 0 : index
      %c0_32 = arith.constant 0 : index
      %67 = vector.load %arg23[%66, %c0_31, %c0_32] : memref<4x8x128xf32, #tpu.memory_space<vmem>>, vector<1x8x128xf32>
      %68 = vector.shape_cast %67 : vector<1x8x128xf32> to vector<8x128xf32>
      %69 = vector.broadcast %26 : vector<8x1xf32> to vector<8x128xf32>
      %70 = arith.subf %68, %69 : vector<8x128xf32>
      %71 = vector.broadcast %38 : vector<8x1xf32> to vector<8x128xf32>
      %72 = arith.mulf %70, %71 : vector<8x128xf32>
      %73 = arith.addf %72, %62 : vector<8x128xf32>
      %cst_33 = arith.constant 0.000000e+00 : f32
      %74 = vector.broadcast %cst_33 : f32 to vector<8x128xf32>
      %75 = arith.maximumf %73, %74 : vector<8x128xf32>
      %76 = vector.broadcast %63 : vector<8x1xf32> to vector<8x128xf32>
      %77 = arith.mulf %75, %76 : vector<8x128xf32>
      %cst_34 = arith.constant dense<0.000000e+00> : vector<128xf32>
      %78 = vector.multi_reduction <add>, %77, %cst_34 [0] : vector<8x128xf32> to vector<128xf32>
      %79 = vector.shape_cast %78 : vector<128xf32> to vector<1x128xf32>
      %80 = vector.broadcast %64 : vector<1x1xf32> to vector<1x128xf32>
      %81 = arith.addf %79, %80 : vector<1x128xf32>
      %82 = arith.index_cast %arg2 : i32 to index
      %c0_35 = arith.constant 0 : index
      %c0_36 = arith.constant 0 : index
      %83 = vector.load %arg20[%82, %c0_35, %c0_36] : memref<1x4x128xf32, #tpu.memory_space<vmem>>, vector<1x1x128xf32>
      %84 = vector.shape_cast %83 : vector<1x1x128xf32> to vector<1x128xf32>
      %85 = vector.shape_cast %81 : vector<1x128xf32> to vector<1x1x128xf32>
      tpu.vector_store %arg20[%82, %c0_35, %c0_36], %85 {strides = array<i32>} : memref<1x4x128xf32, #tpu.memory_space<vmem>>, vector<1x1x128xf32>,
      %86 = arith.mulf %81, %7 : vector<1x128xf32>
      %c0_37 = arith.constant 0 : index
      %c0_38 = arith.constant 0 : index
      %87 = vector.load %arg18[%c0_37, %c0_38] : memref<1x128xf32, #tpu.memory_space<vmem>>, vector<1x128xf32>
      %88 = arith.addf %87, %86 : vector<1x128xf32>
      %c0_39 = arith.constant 0 : index
      %c0_40 = arith.constant 0 : index
      %89 = vector.load %arg18[%c0_39, %c0_40] : memref<1x128xf32, #tpu.memory_space<vmem>>, vector<1x128xf32>
      tpu.vector_store %arg18[%c0_39, %c0_40], %88 {strides = array<i32>} : memref<1x128xf32, #tpu.memory_space<vmem>>, vector<1x128xf32>,
      %90 = arith.mulf %86, %86 : vector<1x128xf32>
      %c0_41 = arith.constant 0 : index
      %c0_42 = arith.constant 0 : index
      %91 = vector.load %arg19[%c0_41, %c0_42] : memref<1x128xf32, #tpu.memory_space<vmem>>, vector<1x128xf32>
      %92 = arith.addf %91, %90 : vector<1x128xf32>
      %c0_43 = arith.constant 0 : index
      %c0_44 = arith.constant 0 : index
      %93 = vector.load %arg19[%c0_43, %c0_44] : memref<1x128xf32, #tpu.memory_space<vmem>>, vector<1x128xf32>
      tpu.vector_store %arg19[%c0_43, %c0_44], %92 {strides = array<i32>} : memref<1x128xf32, #tpu.memory_space<vmem>>, vector<1x128xf32>,
      %c1_i32_45 = arith.constant 1 : i32
      %94 = arith.addi %c1_i32_45, %arg2 : i32
      %95 = arith.index_cast %94 : i32 to index
      %c0_46 = arith.constant 0 : index
      %c0_47 = arith.constant 0 : index
      %96 = vector.load %arg23[%95, %c0_46, %c0_47] : memref<4x8x128xf32, #tpu.memory_space<vmem>>, vector<1x8x128xf32>
      %97 = vector.shape_cast %96 : vector<1x8x128xf32> to vector<8x128xf32>
      %98 = vector.broadcast %26 : vector<8x1xf32> to vector<8x128xf32>
      %99 = arith.subf %97, %98 : vector<8x128xf32>
      %100 = vector.broadcast %38 : vector<8x1xf32> to vector<8x128xf32>
      %101 = arith.mulf %99, %100 : vector<8x128xf32>
      %102 = arith.addf %101, %62 : vector<8x128xf32>
      %cst_48 = arith.constant 0.000000e+00 : f32
      %103 = vector.broadcast %cst_48 : f32 to vector<8x128xf32>
      %104 = arith.maximumf %102, %103 : vector<8x128xf32>
      %105 = vector.broadcast %63 : vector<8x1xf32> to vector<8x128xf32>
      %106 = arith.mulf %104, %105 : vector<8x128xf32>
      %cst_49 = arith.constant dense<0.000000e+00> : vector<128xf32>
      %107 = vector.multi_reduction <add>, %106, %cst_49 [0] : vector<8x128xf32> to vector<128xf32>
      %108 = vector.shape_cast %107 : vector<128xf32> to vector<1x128xf32>
      %109 = vector.broadcast %64 : vector<1x1xf32> to vector<1x128xf32>
      %110 = arith.addf %108, %109 : vector<1x128xf32>
      %111 = arith.index_cast %arg2 : i32 to index
      %c1 = arith.constant 1 : index
      %c0_50 = arith.constant 0 : index
      %112 = vector.load %arg20[%111, %c1, %c0_50] : memref<1x4x128xf32, #tpu.memory_space<vmem>>, vector<1x1x128xf32>
      %113 = vector.shape_cast %112 : vector<1x1x128xf32> to vector<1x128xf32>
      %114 = vector.shape_cast %110 : vector<1x128xf32> to vector<1x1x128xf32>
      tpu.vector_store %arg20[%111, %c1, %c0_50], %114 {strides = array<i32>} : memref<1x4x128xf32, #tpu.memory_space<vmem>>, vector<1x1x128xf32>,
      %115 = arith.mulf %110, %7 : vector<1x128xf32>
      %c0_51 = arith.constant 0 : index
      %c0_52 = arith.constant 0 : index
      %116 = vector.load %arg18[%c0_51, %c0_52] : memref<1x128xf32, #tpu.memory_space<vmem>>, vector<1x128xf32>
      %117 = arith.addf %116, %115 : vector<1x128xf32>
      %c0_53 = arith.constant 0 : index
      %c0_54 = arith.constant 0 : index
      %118 = vector.load %arg18[%c0_53, %c0_54] : memref<1x128xf32, #tpu.memory_space<vmem>>, vector<1x128xf32>
      tpu.vector_store %arg18[%c0_53, %c0_54], %117 {strides = array<i32>} : memref<1x128xf32, #tpu.memory_space<vmem>>, vector<1x128xf32>,
      %119 = arith.mulf %115, %115 : vector<1x128xf32>
      %c0_55 = arith.constant 0 : index
      %c0_56 = arith.constant 0 : index
      %120 = vector.load %arg19[%c0_55, %c0_56] : memref<1x128xf32, #tpu.memory_space<vmem>>, vector<1x128xf32>
      %121 = arith.addf %120, %119 : vector<1x128xf32>
      %c0_57 = arith.constant 0 : index
      %c0_58 = arith.constant 0 : index
      %122 = vector.load %arg19[%c0_57, %c0_58] : memref<1x128xf32, #tpu.memory_space<vmem>>, vector<1x128xf32>
      tpu.vector_store %arg19[%c0_57, %c0_58], %121 {strides = array<i32>} : memref<1x128xf32, #tpu.memory_space<vmem>>, vector<1x128xf32>,
      %c2_i32_59 = arith.constant 2 : i32
      %123 = arith.addi %c2_i32_59, %arg2 : i32
      %124 = arith.index_cast %123 : i32 to index
      %c0_60 = arith.constant 0 : index
      %c0_61 = arith.constant 0 : index
      %125 = vector.load %arg23[%124, %c0_60, %c0_61] : memref<4x8x128xf32, #tpu.memory_space<vmem>>, vector<1x8x128xf32>
      %126 = vector.shape_cast %125 : vector<1x8x128xf32> to vector<8x128xf32>
      %127 = vector.broadcast %26 : vector<8x1xf32> to vector<8x128xf32>
      %128 = arith.subf %126, %127 : vector<8x128xf32>
      %129 = vector.broadcast %38 : vector<8x1xf32> to vector<8x128xf32>
      %130 = arith.mulf %128, %129 : vector<8x128xf32>
      %131 = arith.addf %130, %62 : vector<8x128xf32>
      %cst_62 = arith.constant 0.000000e+00 : f32
      %132 = vector.broadcast %cst_62 : f32 to vector<8x128xf32>
      %133 = arith.maximumf %131, %132 : vector<8x128xf32>
      %134 = vector.broadcast %63 : vector<8x1xf32> to vector<8x128xf32>
      %135 = arith.mulf %133, %134 : vector<8x128xf32>
      %cst_63 = arith.constant dense<0.000000e+00> : vector<128xf32>
      %136 = vector.multi_reduction <add>, %135, %cst_63 [0] : vector<8x128xf32> to vector<128xf32>
      %137 = vector.shape_cast %136 : vector<128xf32> to vector<1x128xf32>
      %138 = vector.broadcast %64 : vector<1x1xf32> to vector<1x128xf32>
      %139 = arith.addf %137, %138 : vector<1x128xf32>
      %140 = arith.index_cast %arg2 : i32 to index
      %c2 = arith.constant 2 : index
      %c0_64 = arith.constant 0 : index
      %141 = vector.load %arg20[%140, %c2, %c0_64] : memref<1x4x128xf32, #tpu.memory_space<vmem>>, vector<1x1x128xf32>
      %142 = vector.shape_cast %141 : vector<1x1x128xf32> to vector<1x128xf32>
      %143 = vector.shape_cast %139 : vector<1x128xf32> to vector<1x1x128xf32>
      tpu.vector_store %arg20[%140, %c2, %c0_64], %143 {strides = array<i32>} : memref<1x4x128xf32, #tpu.memory_space<vmem>>, vector<1x1x128xf32>,
      %144 = arith.mulf %139, %7 : vector<1x128xf32>
      %c0_65 = arith.constant 0 : index
      %c0_66 = arith.constant 0 : index
      %145 = vector.load %arg18[%c0_65, %c0_66] : memref<1x128xf32, #tpu.memory_space<vmem>>, vector<1x128xf32>
      %146 = arith.addf %145, %144 : vector<1x128xf32>
      %c0_67 = arith.constant 0 : index
      %c0_68 = arith.constant 0 : index
      %147 = vector.load %arg18[%c0_67, %c0_68] : memref<1x128xf32, #tpu.memory_space<vmem>>, vector<1x128xf32>
      tpu.vector_store %arg18[%c0_67, %c0_68], %146 {strides = array<i32>} : memref<1x128xf32, #tpu.memory_space<vmem>>, vector<1x128xf32>,
      %148 = arith.mulf %144, %144 : vector<1x128xf32>
      %c0_69 = arith.constant 0 : index
      %c0_70 = arith.constant 0 : index
      %149 = vector.load %arg19[%c0_69, %c0_70] : memref<1x128xf32, #tpu.memory_space<vmem>>, vector<1x128xf32>
      %150 = arith.addf %149, %148 : vector<1x128xf32>
      %c0_71 = arith.constant 0 : index
      %c0_72 = arith.constant 0 : index
      %151 = vector.load %arg19[%c0_71, %c0_72] : memref<1x128xf32, #tpu.memory_space<vmem>>, vector<1x128xf32>
      tpu.vector_store %arg19[%c0_71, %c0_72], %150 {strides = array<i32>} : memref<1x128xf32, #tpu.memory_space<vmem>>, vector<1x128xf32>,
      %c3_i32 = arith.constant 3 : i32
      %152 = arith.addi %c3_i32, %arg2 : i32
      %153 = arith.index_cast %152 : i32 to index
      %c0_73 = arith.constant 0 : index
      %c0_74 = arith.constant 0 : index
      %154 = vector.load %arg23[%153, %c0_73, %c0_74] : memref<4x8x128xf32, #tpu.memory_space<vmem>>, vector<1x8x128xf32>
      %155 = vector.shape_cast %154 : vector<1x8x128xf32> to vector<8x128xf32>
      %156 = vector.broadcast %26 : vector<8x1xf32> to vector<8x128xf32>
      %157 = arith.subf %155, %156 : vector<8x128xf32>
      %158 = vector.broadcast %38 : vector<8x1xf32> to vector<8x128xf32>
      %159 = arith.mulf %157, %158 : vector<8x128xf32>
      %160 = arith.addf %159, %62 : vector<8x128xf32>
      %cst_75 = arith.constant 0.000000e+00 : f32
      %161 = vector.broadcast %cst_75 : f32 to vector<8x128xf32>
      %162 = arith.maximumf %160, %161 : vector<8x128xf32>
      %163 = vector.broadcast %63 : vector<8x1xf32> to vector<8x128xf32>
      %164 = arith.mulf %162, %163 : vector<8x128xf32>
      %cst_76 = arith.constant dense<0.000000e+00> : vector<128xf32>
      %165 = vector.multi_reduction <add>, %164, %cst_76 [0] : vector<8x128xf32> to vector<128xf32>
      %166 = vector.shape_cast %165 : vector<128xf32> to vector<1x128xf32>
      %167 = vector.broadcast %64 : vector<1x1xf32> to vector<1x128xf32>
      %168 = arith.addf %166, %167 : vector<1x128xf32>
      %169 = arith.index_cast %arg2 : i32 to index
      %c3 = arith.constant 3 : index
      %c0_77 = arith.constant 0 : index
      %170 = vector.load %arg20[%169, %c3, %c0_77] : memref<1x4x128xf32, #tpu.memory_space<vmem>>, vector<1x1x128xf32>
      %171 = vector.shape_cast %170 : vector<1x1x128xf32> to vector<1x128xf32>
      %172 = vector.shape_cast %168 : vector<1x128xf32> to vector<1x1x128xf32>
      tpu.vector_store %arg20[%169, %c3, %c0_77], %172 {strides = array<i32>} : memref<1x4x128xf32, #tpu.memory_space<vmem>>, vector<1x1x128xf32>,
      %173 = arith.mulf %168, %7 : vector<1x128xf32>
      %c0_78 = arith.constant 0 : index
      %c0_79 = arith.constant 0 : index
      %174 = vector.load %arg18[%c0_78, %c0_79] : memref<1x128xf32, #tpu.memory_space<vmem>>, vector<1x128xf32>
      %175 = arith.addf %174, %173 : vector<1x128xf32>
      %c0_80 = arith.constant 0 : index
      %c0_81 = arith.constant 0 : index
      %176 = vector.load %arg18[%c0_80, %c0_81] : memref<1x128xf32, #tpu.memory_space<vmem>>, vector<1x128xf32>
      tpu.vector_store %arg18[%c0_80, %c0_81], %175 {strides = array<i32>} : memref<1x128xf32, #tpu.memory_space<vmem>>, vector<1x128xf32>,
      %177 = arith.mulf %173, %173 : vector<1x128xf32>
      %c0_82 = arith.constant 0 : index
      %c0_83 = arith.constant 0 : index
      %178 = vector.load %arg19[%c0_82, %c0_83] : memref<1x128xf32, #tpu.memory_space<vmem>>, vector<1x128xf32>
      %179 = arith.addf %178, %177 : vector<1x128xf32>
      %c0_84 = arith.constant 0 : index
      %c0_85 = arith.constant 0 : index
      %180 = vector.load %arg19[%c0_84, %c0_85] : memref<1x128xf32, #tpu.memory_space<vmem>>, vector<1x128xf32>
      tpu.vector_store %arg19[%c0_84, %c0_85], %179 {strides = array<i32>} : memref<1x128xf32, #tpu.memory_space<vmem>>, vector<1x128xf32>,
    } else {
    }
    %c2_i32 = arith.constant 2 : i32
    %19 = arith.cmpi eq, %arg1, %c2_i32 : i32
    %20 = arith.extui %19 : i1 to i32
    %c0_i32_5 = arith.constant 0 : i32
    %21 = arith.cmpi ne, %20, %c0_i32_5 : i32
    scf.if %21 {
      %c0 = arith.constant 0 : index
      %c0_6 = arith.constant 0 : index
      %22 = vector.load %arg18[%c0, %c0_6] : memref<1x128xf32, #tpu.memory_space<vmem>>, vector<1x128xf32>
      %cst = arith.constant dense<0.000000e+00> : vector<1xf32>
      %23 = vector.multi_reduction <add>, %22, %cst [1] : vector<1x128xf32> to vector<1xf32>
      %24 = vector.shape_cast %23 : vector<1xf32> to vector<1x1xf32>
      %cst_7 = arith.constant 3.906250e-03 : f32
      %25 = vector.broadcast %cst_7 : f32 to vector<1x1xf32>
      %26 = arith.mulf %24, %25 : vector<1x1xf32>
      %c0_8 = arith.constant 0 : index
      %c0_9 = arith.constant 0 : index
      %27 = vector.load %arg19[%c0_8, %c0_9] : memref<1x128xf32, #tpu.memory_space<vmem>>, vector<1x128xf32>
      %cst_10 = arith.constant dense<0.000000e+00> : vector<1xf32>
      %28 = vector.multi_reduction <add>, %27, %cst_10 [1] : vector<1x128xf32> to vector<1xf32>
      %29 = vector.shape_cast %28 : vector<1xf32> to vector<1x1xf32>
      %cst_11 = arith.constant 3.906250e-03 : f32
      %30 = vector.broadcast %cst_11 : f32 to vector<1x1xf32>
      %31 = arith.mulf %29, %30 : vector<1x1xf32>
      %32 = arith.mulf %26, %26 : vector<1x1xf32>
      %33 = arith.subf %31, %32 : vector<1x1xf32>
      %cst_12 = arith.constant 0.000000e+00 : f32
      %34 = vector.broadcast %cst_12 : f32 to vector<1x1xf32>
      %35 = arith.maximumf %33, %34 : vector<1x1xf32>
      %cst_13 = arith.constant 9.99999974E-6 : f32
      %36 = vector.broadcast %cst_13 : f32 to vector<1x1xf32>
      %37 = arith.addf %35, %36 : vector<1x1xf32>
      %38 = math.rsqrt %37 : vector<1x1xf32>
      %39 = arith.index_cast %arg2 : i32 to index
      %c0_14 = arith.constant 0 : index
      %c0_15 = arith.constant 0 : index
      %40 = vector.load %arg21[%39, %c0_14, %c0_15] : memref<1x8x128xf32, #tpu.memory_space<vmem>>, vector<1x8x128xf32>
      %41 = vector.shape_cast %40 : vector<1x8x128xf32> to vector<8x128xf32>
      %42 = arith.index_cast %arg2 : i32 to index
      %c0_16 = arith.constant 0 : index
      %c0_17 = arith.constant 0 : index
      %43 = vector.load %arg20[%42, %c0_16, %c0_17] : memref<1x4x128xf32, #tpu.memory_space<vmem>>, vector<1x1x128xf32>
      %44 = vector.shape_cast %43 : vector<1x1x128xf32> to vector<1x128xf32>
      %45 = vector.broadcast %26 : vector<1x1xf32> to vector<1x128xf32>
      %46 = arith.subf %44, %45 : vector<1x128xf32>
      %47 = vector.broadcast %38 : vector<1x1xf32> to vector<1x128xf32>
      %48 = arith.mulf %46, %47 : vector<1x128xf32>
      %49 = arith.negf %48 : vector<1x128xf32>
      %50 = math.exp %49 : vector<1x128xf32>
      %cst_18 = arith.constant 1.000000e+00 : f32
      %51 = vector.broadcast %cst_18 : f32 to vector<1x128xf32>
      %52 = arith.addf %51, %50 : vector<1x128xf32>
      %53 = arith.divf %51, %52 : vector<1x128xf32>
      %54 = vector.broadcast %53 : vector<1x128xf32> to vector<8x128xf32>
      %55 = arith.mulf %41, %54 : vector<8x128xf32>
      %c0_19 = arith.constant 0 : index
      %c0_20 = arith.constant 0 : index
      %c0_21 = arith.constant 0 : index
      %c0_22 = arith.constant 0 : index
      %56 = vector.load %arg13[%c0_19, %c0_20, %c0_21, %c0_22] : memref<1x4x8x128xf32, #tpu.memory_space<vmem>>, vector<1x1x8x128xf32>
      %57 = vector.shape_cast %56 : vector<1x1x8x128xf32> to vector<8x128xf32>
      %58 = vector.shape_cast %55 : vector<8x128xf32> to vector<1x1x8x128xf32>
      tpu.vector_store %arg13[%c0_19, %c0_20, %c0_21, %c0_22], %58 {strides = array<i32>} : memref<1x4x8x128xf32, #tpu.memory_space<vmem>>, vector<1x1x8x128xf32>,
      %59 = arith.index_cast %arg2 : i32 to index
      %c1 = arith.constant 1 : index
      %c0_23 = arith.constant 0 : index
      %60 = vector.load %arg20[%59, %c1, %c0_23] : memref<1x4x128xf32, #tpu.memory_space<vmem>>, vector<1x1x128xf32>
      %61 = vector.shape_cast %60 : vector<1x1x128xf32> to vector<1x128xf32>
      %62 = vector.broadcast %26 : vector<1x1xf32> to vector<1x128xf32>
      %63 = arith.subf %61, %62 : vector<1x128xf32>
      %64 = vector.broadcast %38 : vector<1x1xf32> to vector<1x128xf32>
      %65 = arith.mulf %63, %64 : vector<1x128xf32>
      %66 = arith.negf %65 : vector<1x128xf32>
      %67 = math.exp %66 : vector<1x128xf32>
      %cst_24 = arith.constant 1.000000e+00 : f32
      %68 = vector.broadcast %cst_24 : f32 to vector<1x128xf32>
      %69 = arith.addf %68, %67 : vector<1x128xf32>
      %70 = arith.divf %68, %69 : vector<1x128xf32>
      %71 = vector.broadcast %70 : vector<1x128xf32> to vector<8x128xf32>
      %72 = arith.mulf %41, %71 : vector<8x128xf32>
      %c0_25 = arith.constant 0 : index
      %c1_26 = arith.constant 1 : index
      %c0_27 = arith.constant 0 : index
      %c0_28 = arith.constant 0 : index
      %73 = vector.load %arg13[%c0_25, %c1_26, %c0_27, %c0_28] : memref<1x4x8x128xf32, #tpu.memory_space<vmem>>, vector<1x1x8x128xf32>
      %74 = vector.shape_cast %73 : vector<1x1x8x128xf32> to vector<8x128xf32>
      %75 = vector.shape_cast %72 : vector<8x128xf32> to vector<1x1x8x128xf32>
      tpu.vector_store %arg13[%c0_25, %c1_26, %c0_27, %c0_28], %75 {strides = array<i32>} : memref<1x4x8x128xf32, #tpu.memory_space<vmem>>, vector<1x1x8x128xf32>,
      %76 = arith.index_cast %arg2 : i32 to index
      %c2 = arith.constant 2 : index
      %c0_29 = arith.constant 0 : index
      %77 = vector.load %arg20[%76, %c2, %c0_29] : memref<1x4x128xf32, #tpu.memory_space<vmem>>, vector<1x1x128xf32>
      %78 = vector.shape_cast %77 : vector<1x1x128xf32> to vector<1x128xf32>
      %79 = vector.broadcast %26 : vector<1x1xf32> to vector<1x128xf32>
      %80 = arith.subf %78, %79 : vector<1x128xf32>
      %81 = vector.broadcast %38 : vector<1x1xf32> to vector<1x128xf32>
      %82 = arith.mulf %80, %81 : vector<1x128xf32>
      %83 = arith.negf %82 : vector<1x128xf32>
      %84 = math.exp %83 : vector<1x128xf32>
      %cst_30 = arith.constant 1.000000e+00 : f32
      %85 = vector.broadcast %cst_30 : f32 to vector<1x128xf32>
      %86 = arith.addf %85, %84 : vector<1x128xf32>
      %87 = arith.divf %85, %86 : vector<1x128xf32>
      %88 = vector.broadcast %87 : vector<1x128xf32> to vector<8x128xf32>
      %89 = arith.mulf %41, %88 : vector<8x128xf32>
      %c0_31 = arith.constant 0 : index
      %c2_32 = arith.constant 2 : index
      %c0_33 = arith.constant 0 : index
      %c0_34 = arith.constant 0 : index
      %90 = vector.load %arg13[%c0_31, %c2_32, %c0_33, %c0_34] : memref<1x4x8x128xf32, #tpu.memory_space<vmem>>, vector<1x1x8x128xf32>
      %91 = vector.shape_cast %90 : vector<1x1x8x128xf32> to vector<8x128xf32>
      %92 = vector.shape_cast %89 : vector<8x128xf32> to vector<1x1x8x128xf32>
      tpu.vector_store %arg13[%c0_31, %c2_32, %c0_33, %c0_34], %92 {strides = array<i32>} : memref<1x4x8x128xf32, #tpu.memory_space<vmem>>, vector<1x1x8x128xf32>,
      %93 = arith.index_cast %arg2 : i32 to index
      %c3 = arith.constant 3 : index
      %c0_35 = arith.constant 0 : index
      %94 = vector.load %arg20[%93, %c3, %c0_35] : memref<1x4x128xf32, #tpu.memory_space<vmem>>, vector<1x1x128xf32>
      %95 = vector.shape_cast %94 : vector<1x1x128xf32> to vector<1x128xf32>
      %96 = vector.broadcast %26 : vector<1x1xf32> to vector<1x128xf32>
      %97 = arith.subf %95, %96 : vector<1x128xf32>
      %98 = vector.broadcast %38 : vector<1x1xf32> to vector<1x128xf32>
      %99 = arith.mulf %97, %98 : vector<1x128xf32>
      %100 = arith.negf %99 : vector<1x128xf32>
      %101 = math.exp %100 : vector<1x128xf32>
      %cst_36 = arith.constant 1.000000e+00 : f32
      %102 = vector.broadcast %cst_36 : f32 to vector<1x128xf32>
      %103 = arith.addf %102, %101 : vector<1x128xf32>
      %104 = arith.divf %102, %103 : vector<1x128xf32>
      %105 = vector.broadcast %104 : vector<1x128xf32> to vector<8x128xf32>
      %106 = arith.mulf %41, %105 : vector<8x128xf32>
      %c0_37 = arith.constant 0 : index
      %c3_38 = arith.constant 3 : index
      %c0_39 = arith.constant 0 : index
      %c0_40 = arith.constant 0 : index
      %107 = vector.load %arg13[%c0_37, %c3_38, %c0_39, %c0_40] : memref<1x4x8x128xf32, #tpu.memory_space<vmem>>, vector<1x1x8x128xf32>
      %108 = vector.shape_cast %107 : vector<1x1x8x128xf32> to vector<8x128xf32>
      %109 = vector.shape_cast %106 : vector<8x128xf32> to vector<1x1x8x128xf32>
      tpu.vector_store %arg13[%c0_37, %c3_38, %c0_39, %c0_40], %109 {strides = array<i32>} : memref<1x4x8x128xf32, #tpu.memory_space<vmem>>, vector<1x1x8x128xf32>,
    } else {
    }
    return
  }
  func.func @transform_0(%arg0: i32, %arg1: i32, %arg2: i32) -> (i32, i32, i32, i32) {
    %c0_i32 = arith.constant 0 : i32
    %0 = arith.cmpi eq, %arg1, %c0_i32 : i32
    %c0_i32_0 = arith.constant 0 : i32
    %1 = arith.select %0, %arg2, %c0_i32_0 : i32
    %c0_i32_1 = arith.constant 0 : i32
    %c0_i32_2 = arith.constant 0 : i32
    %c0_i32_3 = arith.constant 0 : i32
    return %arg0, %c0_i32_1, %c0_i32_2, %1 : i32, i32, i32, i32
  }
  func.func @transform_1(%arg0: i32, %arg1: i32, %arg2: i32) -> (i32, i32, i32) {
    %c0_i32 = arith.constant 0 : i32
    %0 = arith.cmpi eq, %arg1, %c0_i32 : i32
    %c0_i32_0 = arith.constant 0 : i32
    %1 = arith.select %0, %arg2, %c0_i32_0 : i32
    %c0_i32_1 = arith.constant 0 : i32
    %c0_i32_2 = arith.constant 0 : i32
    return %arg0, %c0_i32_1, %1 : i32, i32, i32
  }
  func.func @transform_2(%arg0: i32, %arg1: i32, %arg2: i32) -> (i32, i32) {
    %c0_i32 = arith.constant 0 : i32
    %c0_i32_0 = arith.constant 0 : i32
    %c0_i32_1 = arith.constant 0 : i32
    return %c0_i32, %c0_i32_0 : i32, i32
  }
  func.func @transform_3(%arg0: i32, %arg1: i32, %arg2: i32) -> (i32, i32) {
    %c0_i32 = arith.constant 0 : i32
    %c0_i32_0 = arith.constant 0 : i32
    %c0_i32_1 = arith.constant 0 : i32
    return %c0_i32, %c0_i32_0 : i32, i32
  }
  func.func @transform_4(%arg0: i32, %arg1: i32, %arg2: i32) -> (i32, i32) {
    %c0_i32 = arith.constant 0 : i32
    %c0_i32_0 = arith.constant 0 : i32
    %c0_i32_1 = arith.constant 0 : i32
    return %c0_i32, %c0_i32_0 : i32, i32
  }
  func.func @transform_5(%arg0: i32, %arg1: i32, %arg2: i32) -> (i32, i32) {
    %c0_i32 = arith.constant 0 : i32
    %c0_i32_0 = arith.constant 0 : i32
    %c0_i32_1 = arith.constant 0 : i32
    return %c0_i32, %c0_i32_0 : i32, i32
  }
  func.func @transform_6(%arg0: i32, %arg1: i32, %arg2: i32) -> (i32, i32) {
    %c0_i32 = arith.constant 0 : i32
    %c0_i32_0 = arith.constant 0 : i32
    %c0_i32_1 = arith.constant 0 : i32
    return %c0_i32, %c0_i32_0 : i32, i32
  }
  func.func @transform_7(%arg0: i32, %arg1: i32, %arg2: i32) -> (i32, i32) {
    %c0_i32 = arith.constant 0 : i32
    %c0_i32_0 = arith.constant 0 : i32
    %c0_i32_1 = arith.constant 0 : i32
    return %c0_i32, %c0_i32_0 : i32, i32
  }
  func.func @transform_8(%arg0: i32, %arg1: i32, %arg2: i32) -> (i32, i32) {
    %c0_i32 = arith.constant 0 : i32
    %c0_i32_0 = arith.constant 0 : i32
    %c0_i32_1 = arith.constant 0 : i32
    return %c0_i32, %c0_i32_0 : i32, i32
  }
  func.func @transform_9(%arg0: i32, %arg1: i32, %arg2: i32) -> (i32, i32) {
    %c0_i32 = arith.constant 0 : i32
    %c0_i32_0 = arith.constant 0 : i32
    %c0_i32_1 = arith.constant 0 : i32
    return %c0_i32, %c0_i32_0 : i32, i32
  }
  func.func @transform_10(%arg0: i32, %arg1: i32, %arg2: i32) -> (i32, i32, i32, i32) {
    %c2_i32 = arith.constant 2 : i32
    %0 = arith.cmpi eq, %arg1, %c2_i32 : i32
    %c0_i32 = arith.constant 0 : i32
    %1 = arith.select %0, %arg2, %c0_i32 : i32
    %c0_i32_0 = arith.constant 0 : i32
    %c0_i32_1 = arith.constant 0 : i32
    %c0_i32_2 = arith.constant 0 : i32
    return %arg0, %c0_i32_0, %c0_i32_1, %1 : i32, i32, i32, i32
  }
}

</mosaic_0001>

<llo_original>
// kernel: tpu_custom_call.1
$region0: #{tpu_custom_call.1}
  #allocation0 [shape = 'u32[]', space=smem, size = 0x4, offset = 0x4, fixed_abs, tag = 'smem constant byte address 0x4 - core index']
  #allocation1 [shape = 'u32[144,128]{1,0:T(1,128)}', space=vmem, size = 0x12000, scoped, tag = 'internal scratch']
  #allocation2 [shape = 'f32[8,128]{1,0:T(8,128)}', space=vmem, size = 0x1000, scoped, tag = 'scratch operand']
  #allocation3 [shape = 'f32[8,128]{1,0:T(8,128)}', space=vmem, size = 0x1000, scoped, tag = 'scratch operand']
  #allocation4 [shape = 'f32[8,128]{1,0:T(8,128)}', space=vmem, size = 0x1000, scoped, tag = 'scratch operand']
  #allocation5 [shape = 'f32[8,128]{1,0:T(8,128)}', space=vmem, size = 0x1000, scoped, tag = 'scratch operand']
  #allocation6 [shape = 'f32[1,128]{1,0:T(1,128)}', space=vmem, size = 0x200, scoped, tag = 'scratch operand']
  #allocation7 [shape = 'f32[1,128]{1,0:T(1,128)}', space=vmem, size = 0x200, scoped, tag = 'scratch operand']
  #allocation8 [shape = 'f32[1,4,128]{2,1,0:T(4,128)}', space=vmem, size = 0x800, scoped, tag = 'scratch operand']
  #allocation9 [shape = 'f32[1,8,128]{2,1,0:T(8,128)}', space=vmem, size = 0x1000, scoped, tag = 'scratch operand']
  #allocation10 [shape = 'f32[1,8,128]{2,1,0:T(8,128)}', space=vmem, size = 0x1000, scoped, tag = 'scratch operand']
  #allocation11 [shape = 'f32[4,8,128]{2,1,0:T(8,128)}', space=vmem, size = 0x4000, scoped, tag = 'scratch operand']
  #allocation12 [shape = 'f32[1,1]{1,0:T(1,128)S(1)}', space=vmem, size = 0x200, scoped, tag = 'scoped memory for tpu_custom_call.1']
  %s0 = inlined_call_operand.hbm [shape: f32[2,4,8,128], index: 0, kind: input, shape index: {}]
  %s1 = inlined_call_operand.vmem [shape: f32[2,8,128], index: 1, kind: input, shape index: {}]
  %s2 = inlined_call_operand.vmem [shape: f32[8,8], index: 2, kind: input, shape index: {}]
  %s3 = inlined_call_operand.vmem [shape: f32[8,1], index: 3, kind: input, shape index: {}]
  %s4 = inlined_call_operand.vmem [shape: f32[8,8], index: 4, kind: input, shape index: {}]
  %s5 = inlined_call_operand.vmem [shape: f32[8,1], index: 5, kind: input, shape index: {}]
  %s6 = inlined_call_operand.vmem [shape: f32[8,8], index: 6, kind: input, shape index: {}]
  %s7 = inlined_call_operand.vmem [shape: f32[8,1], index: 7, kind: input, shape index: {}]
  %s8 = inlined_call_operand.vmem [shape: f32[8,1], index: 8, kind: input, shape index: {}]
  %s9 = inlined_call_operand.<no memory space> [shape: f32[1,1], index: 9, kind: input, shape index: {}]
  %s10 = inlined_call_operand.hbm [shape: f32[2,4,8,128], index: 10, kind: output, shape index: {}]
  %s11 = sld [smem:[#allocation0]]
  $region100: #{tpu_custom_call.1} parent=0
    _
  %s13 = ssub.s32 1, %s11
  %s14 = scalar_select 0, %s13, %s11
  %v15 = vstv %s9
  %16 = vst [vmem:[#allocation12] sm:$0x1] %v15
  $region1: #{tpu_custom_call.1} parent=0
    #allocation13 [shape = 'u8[32768]{0}', space=vmem, size = 0x8000, scoped, tag = 'input window, operand 0']
    #allocation14 [shape = 's32[2]{0}', space=sflag, size = 0x8, scoped, tag = 'scoped memory for tpu_custom_call.1']
    #allocation15 [shape = 's32[2]{0}', space=sflag, size = 0x8, scoped, tag = 'scoped memory for tpu_custom_call.1']
    #allocation16 [shape = 'u8[32768]{0}', space=vmem, size = 0x8000, scoped, tag = 'output window, operand 0']
    %17 = vsyncpa [#allocation14], 0
    %s18 = scalar_lea.sflag [#allocation14], 1
    %19 = vsyncpa %s18, 0
    %20 = vsyncpa [#allocation15], 0
    %s21 = scalar_lea.sflag [#allocation15], 1
    %22 = vsyncpa %s21, 0
    loop: start=0, step=1, limit=8
    $region2: #{tpu_custom_call.1} parent=1 // loop_pre_header
      _
    $region3: #{tpu_custom_call.1} parent=1 // loop_header
      %s24 = sphi 0, %s28
      %p25 = scmp.ge.s32.totalorder %s24, 8
      %s31 = sphi 0, %s50
      %s32 = sphi 0, %s46
      %s33 = sphi 0, %s42
      %s34 = sphi 0, %s31
      %s35 = sphi 0, %s32
      %s36 = sphi 0, %s33
      %s37 = sphi 0, %s34
      %s38 = sphi 0, %s35
      %s39 = sphi 0, %s36
      %s59 = sphi 0, %s61
      %s62 = sphi 0, %s59
      %s63 = sphi 0, %s62
      %s79 = sphi 0, %s63
      %s91 = sphi 0, %s93
      %s94 = sphi 0, %s91
      %s95 = sphi 0, %s94
      %s111 = sphi 0, %s95
      %s115 = sphi 0, %s115
      %s117 = sphi 0, %s115
      %s118 = sphi 0, %s117
      %s132 = sphi 0, %s118
      %s136 = sphi 0, %s136
      %s138 = sphi 0, %s136
      %s139 = sphi 0, %s138
      %s153 = sphi 0, %s139
      %s157 = sphi 0, %s157
      %s159 = sphi 0, %s157
      %s160 = sphi 0, %s159
      %s174 = sphi 0, %s160
      %s178 = sphi 0, %s178
      %s180 = sphi 0, %s178
      %s181 = sphi 0, %s180
      %s195 = sphi 0, %s181
      %s199 = sphi 0, %s199
      %s201 = sphi 0, %s199
      %s202 = sphi 0, %s201
      %s216 = sphi 0, %s202
      %s220 = sphi 0, %s220
      %s222 = sphi 0, %s220
      %s223 = sphi 0, %s222
      %s237 = sphi 0, %s223
      %s241 = sphi 0, %s241
      %s243 = sphi 0, %s241
      %s244 = sphi 0, %s243
      %s258 = sphi 0, %s244
      %s262 = sphi 0, %s262
      %s264 = sphi 0, %s262
      %s265 = sphi 0, %s264
      %s279 = sphi 0, %s265
      %s291 = sphi 0, %s293
      %s294 = sphi 0, %s291
      %s295 = sphi 0, %s294
      %s311 = sphi 0, %s295
    $region4: #{tpu_custom_call.1} parent=1 // loop_header_branch
      %27 = sbr.rel (%p25) target = $region8
    $region5: #{tpu_custom_call.1} parent=1 // loop_body
      %s29 = ssub.s32 %s24, 1
      %s30 = ssub.s32 %s24, 2
      %s40 = sadd.s32 1, %s33
      %p41 = scmp.ge.s32.totalorder %s40, 1
      %s42 = scalar_select %p41, 0, %s40
      %s43 = sadd.s32 1, %s32
      %s44 = scalar_select %p41, %s43, %s32
      %p45 = scmp.ge.s32.totalorder %s44, 3
      %s46 = scalar_select %p45, 0, %s44
      %s47 = sadd.s32 1, %s31
      %s48 = scalar_select %p45, %s47, %s31
      %p49 = scmp.ge.s32.totalorder %s48, 2
      %s50 = scalar_select %p49, 0, %s48
      %p51 = scmp.eq.s32.totalorder %s32, 0
      %s52 = scalar_select %p51, %s33, 0
      %p53 = scmp.eq.s32.totalorder %s46, 0
      %s54 = scalar_select %p53, %s42, 0
      %s55 = ssub.s32 %s31, %s50
      %s56 = ssub.s32 %s52, %s54
      %s57 = sor.u32 %s55, %s56
      %p58 = scmp.eq.s32.totalorder %s57, 0
      %s60 = sadd.s32 %s59, 1
      %s61 = scalar_select %p58, %s59, %s60
      %p64 = pneg %p58
      %p65 = scmp.eq.s32.totalorder %s24, 5
      %p66 = por %p64, %p65
      %p67 = scmp.ne.s32.totalorder %s59, %s62
      %p68 = scmp.eq.s32.totalorder %s24, 0
      %p69 = por %p67, %p68
      %p70 = scmp.ne.s32.totalorder %s59, %s62
      %p71 = scmp.eq.s32.totalorder %s29, 5
      %p72 = por %p70, %p71
      %p73 = scmp.ne.s32.totalorder %s62, %s63
      %p74 = scmp.eq.s32.totalorder %s29, 0
      %p75 = por %p73, %p74
      %p76 = scmp.ne.s32.totalorder %s62, %s63
      %p77 = scmp.eq.s32.totalorder %s30, 5
      %p78 = por %p76, %p77
      %p80 = scmp.ne.s32.totalorder %s63, %s79
      %p81 = scmp.eq.s32.totalorder %s30, 0
      %p82 = por %p80, %p81
      %p83 = scmp.eq.s32.totalorder %s32, 0
      %s84 = scalar_select %p83, %s33, 0
      %p85 = scmp.eq.s32.totalorder %s46, 0
      %s86 = scalar_select %p85, %s42, 0
      %s87 = ssub.s32 %s31, %s50
      %s88 = ssub.s32 %s84, %s86
      %s89 = sor.u32 %s87, %s88
      %p90 = scmp.eq.s32.totalorder %s89, 0
      %s92 = sadd.s32 %s91, 1
      %s93 = scalar_select %p90, %s91, %s92
      %p96 = pneg %p90
      %p97 = scmp.eq.s32.totalorder %s24, 5
      %p98 = por %p96, %p97
      %p99 = scmp.ne.s32.totalorder %s91, %s94
      %p100 = scmp.eq.s32.totalorder %s24, 0
      %p101 = por %p99, %p100
      %p102 = scmp.ne.s32.totalorder %s91, %s94
      %p103 = scmp.eq.s32.totalorder %s29, 5
      %p104 = por %p102, %p103
      %p105 = scmp.ne.s32.totalorder %s94, %s95
      %p106 = scmp.eq.s32.totalorder %s29, 0
      %p107 = por %p105, %p106
      %p108 = scmp.ne.s32.totalorder %s94, %s95
      %p109 = scmp.eq.s32.totalorder %s30, 5
      %p110 = por %p108, %p109
      %p112 = scmp.ne.s32.totalorder %s95, %s111
      %p113 = scmp.eq.s32.totalorder %s30, 0
      %p114 = por %p112, %p113
      %s116 = sadd.s32 %s115, 1
      %p119 = scmp.eq.s32.totalorder %s24, 5
      %p120 = scmp.ne.s32.totalorder %s115, %s117
      %p121 = scmp.eq.s32.totalorder %s24, 0
      %p122 = por %p120, %p121
      %p123 = scmp.ne.s32.totalorder %s115, %s117
      %p124 = scmp.eq.s32.totalorder %s29, 5
      %p125 = por %p123, %p124
      %p126 = scmp.ne.s32.totalorder %s117, %s118
      %p127 = scmp.eq.s32.totalorder %s29, 0
      %p128 = por %p126, %p127
      %p129 = scmp.ne.s32.totalorder %s117, %s118
      %p130 = scmp.eq.s32.totalorder %s30, 5
      %p131 = por %p129, %p130
      %p133 = scmp.ne.s32.totalorder %s118, %s132
      %p134 = scmp.eq.s32.totalorder %s30, 0
      %p135 = por %p133, %p134
      %s137 = sadd.s32 %s136, 1
      %p140 = scmp.eq.s32.totalorder %s24, 5
      %p141 = scmp.ne.s32.totalorder %s136, %s138
      %p142 = scmp.eq.s32.totalorder %s24, 0
      %p143 = por %p141, %p142
      %p144 = scmp.ne.s32.totalorder %s136, %s138
      %p145 = scmp.eq.s32.totalorder %s29, 5
      %p146 = por %p144, %p145
      %p147 = scmp.ne.s32.totalorder %s138, %s139
      %p148 = scmp.eq.s32.totalorder %s29, 0
      %p149 = por %p147, %p148
      %p150 = scmp.ne.s32.totalorder %s138, %s139
      %p151 = scmp.eq.s32.totalorder %s30, 5
      %p152 = por %p150, %p151
      %p154 = scmp.ne.s32.totalorder %s139, %s153
      %p155 = scmp.eq.s32.totalorder %s30, 0
      %p156 = por %p154, %p155
      %s158 = sadd.s32 %s157, 1
      %p161 = scmp.eq.s32.totalorder %s24, 5
      %p162 = scmp.ne.s32.totalorder %s157, %s159
      %p163 = scmp.eq.s32.totalorder %s24, 0
      %p164 = por %p162, %p163
      %p165 = scmp.ne.s32.totalorder %s157, %s159
      %p166 = scmp.eq.s32.totalorder %s29, 5
      %p167 = por %p165, %p166
      %p168 = scmp.ne.s32.totalorder %s159, %s160
      %p169 = scmp.eq.s32.totalorder %s29, 0
      %p170 = por %p168, %p169
      %p171 = scmp.ne.s32.totalorder %s159, %s160
      %p172 = scmp.eq.s32.totalorder %s30, 5
      %p173 = por %p171, %p172
      %p175 = scmp.ne.s32.totalorder %s160, %s174
      %p176 = scmp.eq.s32.totalorder %s30, 0
      %p177 = por %p175, %p176
      %s179 = sadd.s32 %s178, 1
      %p182 = scmp.eq.s32.totalorder %s24, 5
      %p183 = scmp.ne.s32.totalorder %s178, %s180
      %p184 = scmp.eq.s32.totalorder %s24, 0
      %p185 = por %p183, %p184
      %p186 = scmp.ne.s32.totalorder %s178, %s180
      %p187 = scmp.eq.s32.totalorder %s29, 5
      %p188 = por %p186, %p187
      %p189 = scmp.ne.s32.totalorder %s180, %s181
      %p190 = scmp.eq.s32.totalorder %s29, 0
      %p191 = por %p189, %p190
      %p192 = scmp.ne.s32.totalorder %s180, %s181
      %p193 = scmp.eq.s32.totalorder %s30, 5
      %p194 = por %p192, %p193
      %p196 = scmp.ne.s32.totalorder %s181, %s195
      %p197 = scmp.eq.s32.totalorder %s30, 0
      %p198 = por %p196, %p197
      %s200 = sadd.s32 %s199, 1
      %p203 = scmp.eq.s32.totalorder %s24, 5
      %p204 = scmp.ne.s32.totalorder %s199, %s201
      %p205 = scmp.eq.s32.totalorder %s24, 0
      %p206 = por %p204, %p205
      %p207 = scmp.ne.s32.totalorder %s199, %s201
      %p208 = scmp.eq.s32.totalorder %s29, 5
      %p209 = por %p207, %p208
      %p210 = scmp.ne.s32.totalorder %s201, %s202
      %p211 = scmp.eq.s32.totalorder %s29, 0
      %p212 = por %p210, %p211
      %p213 = scmp.ne.s32.totalorder %s201, %s202
      %p214 = scmp.eq.s32.totalorder %s30, 5
      %p215 = por %p213, %p214
      %p217 = scmp.ne.s32.totalorder %s202, %s216
      %p218 = scmp.eq.s32.totalorder %s30, 0
      %p219 = por %p217, %p218
      %s221 = sadd.s32 %s220, 1
      %p224 = scmp.eq.s32.totalorder %s24, 5
      %p225 = scmp.ne.s32.totalorder %s220, %s222
      %p226 = scmp.eq.s32.totalorder %s24, 0
      %p227 = por %p225, %p226
      %p228 = scmp.ne.s32.totalorder %s220, %s222
      %p229 = scmp.eq.s32.totalorder %s29, 5
      %p230 = por %p228, %p229
      %p231 = scmp.ne.s32.totalorder %s222, %s223
      %p232 = scmp.eq.s32.totalorder %s29, 0
      %p233 = por %p231, %p232
      %p234 = scmp.ne.s32.totalorder %s222, %s223
      %p235 = scmp.eq.s32.totalorder %s30, 5
      %p236 = por %p234, %p235
      %p238 = scmp.ne.s32.totalorder %s223, %s237
      %p239 = scmp.eq.s32.totalorder %s30, 0
      %p240 = por %p238, %p239
      %s242 = sadd.s32 %s241, 1
      %p245 = scmp.eq.s32.totalorder %s24, 5
      %p246 = scmp.ne.s32.totalorder %s241, %s243
      %p247 = scmp.eq.s32.totalorder %s24, 0
      %p248 = por %p246, %p247
      %p249 = scmp.ne.s32.totalorder %s241, %s243
      %p250 = scmp.eq.s32.totalorder %s29, 5
      %p251 = por %p249, %p250
      %p252 = scmp.ne.s32.totalorder %s243, %s244
      %p253 = scmp.eq.s32.totalorder %s29, 0
      %p254 = por %p252, %p253
      %p255 = scmp.ne.s32.totalorder %s243, %s244
      %p256 = scmp.eq.s32.totalorder %s30, 5
      %p257 = por %p255, %p256
      %p259 = scmp.ne.s32.totalorder %s244, %s258
      %p260 = scmp.eq.s32.totalorder %s30, 0
      %p261 = por %p259, %p260
      %s263 = sadd.s32 %s262, 1
      %p266 = scmp.eq.s32.totalorder %s24, 5
      %p267 = scmp.ne.s32.totalorder %s262, %s264
      %p268 = scmp.eq.s32.totalorder %s24, 0
      %p269 = por %p267, %p268
      %p270 = scmp.ne.s32.totalorder %s262, %s264
      %p271 = scmp.eq.s32.totalorder %s29, 5
      %p272 = por %p270, %p271
      %p273 = scmp.ne.s32.totalorder %s264, %s265
      %p274 = scmp.eq.s32.totalorder %s29, 0
      %p275 = por %p273, %p274
      %p276 = scmp.ne.s32.totalorder %s264, %s265
      %p277 = scmp.eq.s32.totalorder %s30, 5
      %p278 = por %p276, %p277
      %p280 = scmp.ne.s32.totalorder %s265, %s279
      %p281 = scmp.eq.s32.totalorder %s30, 0
      %p282 = por %p280, %p281
      %p283 = scmp.eq.s32.totalorder %s32, 2
      %s284 = scalar_select %p283, %s33, 0
      %p285 = scmp.eq.s32.totalorder %s46, 2
      %s286 = scalar_select %p285, %s42, 0
      %s287 = ssub.s32 %s31, %s50
      %s288 = ssub.s32 %s284, %s286
      %s289 = sor.u32 %s287, %s288
      %p290 = scmp.eq.s32.totalorder %s289, 0
      %s292 = sadd.s32 %s291, 1
      %s293 = scalar_select %p290, %s291, %s292
      %p296 = pneg %p290
      %p297 = scmp.eq.s32.totalorder %s24, 5
      %p298 = por %p296, %p297
      %p299 = scmp.ne.s32.totalorder %s291, %s294
      %p300 = scmp.eq.s32.totalorder %s24, 0
      %p301 = por %p299, %p300
      %p302 = scmp.ne.s32.totalorder %s291, %s294
      %p303 = scmp.eq.s32.totalorder %s29, 5
      %p304 = por %p302, %p303
      %p305 = scmp.ne.s32.totalorder %s294, %s295
      %p306 = scmp.eq.s32.totalorder %s29, 0
      %p307 = por %p305, %p306
      %p308 = scmp.ne.s32.totalorder %s294, %s295
      %p309 = scmp.eq.s32.totalorder %s30, 5
      %p310 = por %p308, %p309
      %p312 = scmp.ne.s32.totalorder %s295, %s311
      %p313 = scmp.eq.s32.totalorder %s30, 0
      %p314 = por %p312, %p313
      %p315 = scmp.le.s32.totalorder 1, %s24
      %p316 = scmp.lt.s32.totalorder %s24, 7
      %p317 = pnand %p315, %p316
      %p318 = pneg %p317
      // Predicated region
      $region9: #{tpu_custom_call.1} parent=5 // pred_check
        _
      $region10: #{tpu_custom_call.1} parent=5 // pred_check_branch
        %320 = sbr.rel (%p317) target = $region12
      $region11: #{tpu_custom_call.1} parent=5 // pred_region
        %s321 = ssub.s32 %s24, 1
        // Predicated region
        $region13: #{tpu_custom_call.1} parent=11 // pred_check
          %p322 = pneg %p128
        $region14: #{tpu_custom_call.1} parent=11 // pred_check_branch
          %324 = sbr.rel (%p322) target = $region16
        $region15: #{tpu_custom_call.1} parent=11 // pred_region
          _
        $region16: #{tpu_custom_call.1} parent=11 // pred_fallthru
          _
        // Predicated region
        $region17: #{tpu_custom_call.1} parent=11 // pred_check
          %p325 = pneg %p149
        $region18: #{tpu_custom_call.1} parent=11 // pred_check_branch
          %327 = sbr.rel (%p325) target = $region20
        $region19: #{tpu_custom_call.1} parent=11 // pred_region
          _
        $region20: #{tpu_custom_call.1} parent=11 // pred_fallthru
          _
        // Predicated region
        $region21: #{tpu_custom_call.1} parent=11 // pred_check
          %p328 = pneg %p170
        $region22: #{tpu_custom_call.1} parent=11 // pred_check_branch
          %330 = sbr.rel (%p328) target = $region24
        $region23: #{tpu_custom_call.1} parent=11 // pred_region
          _
        $region24: #{tpu_custom_call.1} parent=11 // pred_fallthru
          _
        // Predicated region
        $region25: #{tpu_custom_call.1} parent=11 // pred_check
          %p331 = pneg %p191
        $region26: #{tpu_custom_call.1} parent=11 // pred_check_branch
          %333 = sbr.rel (%p331) target = $region28
        $region27: #{tpu_custom_call.1} parent=11 // pred_region
          _
        $region28: #{tpu_custom_call.1} parent=11 // pred_fallthru
          _
        // Predicated region
        $region29: #{tpu_custom_call.1} parent=11 // pred_check
          %p334 = pneg %p212
        $region30: #{tpu_custom_call.1} parent=11 // pred_check_branch
          %336 = sbr.rel (%p334) target = $region32
        $region31: #{tpu_custom_call.1} parent=11 // pred_region
          _
        $region32: #{tpu_custom_call.1} parent=11 // pred_fallthru
          _
        // Predicated region
        $region33: #{tpu_custom_call.1} parent=11 // pred_check
          %p337 = pneg %p233
        $region34: #{tpu_custom_call.1} parent=11 // pred_check_branch
          %339 = sbr.rel (%p337) target = $region36
        $region35: #{tpu_custom_call.1} parent=11 // pred_region
          _
        $region36: #{tpu_custom_call.1} parent=11 // pred_fallthru
          _
        // Predicated region
        $region37: #{tpu_custom_call.1} parent=11 // pred_check
          %p340 = pneg %p254
        $region38: #{tpu_custom_call.1} parent=11 // pred_check_branch
          %342 = sbr.rel (%p340) target = $region40
        $region39: #{tpu_custom_call.1} parent=11 // pred_region
          _
        $region40: #{tpu_custom_call.1} parent=11 // pred_fallthru
          _
        // Predicated region
        $region41: #{tpu_custom_call.1} parent=11 // pred_check
          %p343 = pneg %p275
        $region42: #{tpu_custom_call.1} parent=11 // pred_check_branch
          %345 = sbr.rel (%p343) target = $region44
        $region43: #{tpu_custom_call.1} parent=11 // pred_region
          _
        $region44: #{tpu_custom_call.1} parent=11 // pred_fallthru
          _
      $region12: #{tpu_custom_call.1} parent=5 // pred_fallthru
        _
      %p346 = scmp.lt.s32.totalorder %s24, 6
      // Predicated region
      $region45: #{tpu_custom_call.1} parent=5 // pred_check
        %p347 = pneg %p346
      $region46: #{tpu_custom_call.1} parent=5 // pred_check_branch
        %349 = sbr.rel (%p347) target = $region48
      $region47: #{tpu_custom_call.1} parent=5 // pred_region
        // Predicated region
        $region49: #{tpu_custom_call.1} parent=47 // pred_check
          %p350 = pneg %p69
        $region50: #{tpu_custom_call.1} parent=47 // pred_check_branch
          %352 = sbr.rel (%p350) target = $region52
        $region51: #{tpu_custom_call.1} parent=47 // pred_region
          %s353 = sand.u32 %s59, 1
          %s354 = scalar_lea.sflag [#allocation14], %s353
          %s355 = sand.u32 %s59, 1
          %s356 = smul.addr %s355, 32
          %s357 = scalar_lea.vmem [#allocation13], %s356
          %p358 = scmp.eq.s32.totalorder %s32, 0
          %s359 = scalar_select %p358, %s33, 0
          %s361 = ssub.s32 512, 512
          %362 = vsyncadd %s354, %s361
          %s363 = smul.addr %s31, 4
          %s364 = sadd.s32 %s359, %s363
          %s365 = smul.addr %s364, 128
          %s366 = scalar_lea.hbm %s0, %s365
          %s367 = sshll.u32 %s357, 4
          %s368 = int_to_ptr.vmem [resolvable:$true] %s367
          %373 = dma.hbm_to_vmem [thread:$0]  %s366, 512, %s368, %s354, 128, 128, 8
        $region52: #{tpu_custom_call.1} parent=47 // pred_fallthru
          _
        // Predicated region
        $region53: #{tpu_custom_call.1} parent=47 // pred_check
          %p374 = pneg %p101
        $region54: #{tpu_custom_call.1} parent=47 // pred_check_branch
          %376 = sbr.rel (%p374) target = $region56
        $region55: #{tpu_custom_call.1} parent=47 // pred_region
          %p377 = scmp.eq.s32.totalorder %s32, 0
          %s378 = scalar_select %p377, %s33, 0
          %p379 = scmp.lt.s32.totalorder %s31, 1
          %s380 = scalar_select %p379, %s31, 1
          %p381 = scmp.lt.s32.totalorder %s378, 0
          %s382 = scalar_select %p381, %s378, 0
          %s383 = sadd.s32 %s382, %s380
          %s384 = smul.addr %s383, 8
          %s385 = scalar_lea.vmem %s1, %s384
          %p386 = scmp.eq.s32.totalorder %s32, 0
          %s387 = scalar_select %p386, %s33, 0
        $region56: #{tpu_custom_call.1} parent=47 // pred_fallthru
          _
      $region48: #{tpu_custom_call.1} parent=5 // pred_fallthru
        _
      %p388 = scmp.le.s32.totalorder 1, %s24
      %p389 = scmp.lt.s32.totalorder %s24, 7
      %p390 = pnand %p388, %p389
      %p391 = pneg %p390
      // Predicated region
      $region57: #{tpu_custom_call.1} parent=5 // pred_check
        _
      $region58: #{tpu_custom_call.1} parent=5 // pred_check_branch
        %393 = sbr.rel (%p390) target = $region60
      $region59: #{tpu_custom_call.1} parent=5 // pred_region
        %s394 = ssub.s32 %s24, 1
        %s395 = sand.u32 %s62, 1
        %s396 = scalar_lea.sflag [#allocation14], %s395
        %s397 = sand.u32 %s62, 1
        %s398 = smul.addr %s397, 32
        %s399 = scalar_lea.vmem [#allocation13], %s398
        // Predicated region
        $region61: #{tpu_custom_call.1} parent=59 // pred_check
          %p400 = pneg %p75
        $region62: #{tpu_custom_call.1} parent=59 // pred_check_branch
          %402 = sbr.rel (%p400) target = $region64
        $region63: #{tpu_custom_call.1} parent=59 // pred_region
          %403 = dma.done %s396, 512
        $region64: #{tpu_custom_call.1} parent=59 // pred_fallthru
          _
        %s404 = sand.u32 %s62, 1
        %s405 = scalar_lea.sflag [#allocation14], %s404
        %s406 = sand.u32 %s62, 1
        %s407 = smul.addr %s406, 32
        %s408 = scalar_lea.vmem [#allocation13], %s407
        %p409 = pneg %p75
        %p410 = pneg %p72
        %p411 = scmp.eq.s32.totalorder %s35, 0
        %s412 = scalar_select %p411, %s36, 0
        %p413 = scmp.lt.s32.totalorder %s34, 1
        %s414 = scalar_select %p413, %s34, 1
        %p415 = scmp.lt.s32.totalorder %s412, 0
        %s416 = scalar_select %p415, %s412, 0
        %s417 = sadd.s32 %s416, %s414
        %s418 = smul.addr %s417, 8
        %s419 = scalar_lea.vmem %s1, %s418
        %p420 = pneg %p107
        %p421 = pneg %p104
        %p422 = pneg %p128
        %p423 = pneg %p125
        %p424 = pneg %p149
        %p425 = pneg %p146
        %p426 = pneg %p170
        %p427 = pneg %p167
        %p428 = pneg %p191
        %p429 = pneg %p188
        %p430 = pneg %p212
        %p431 = pneg %p209
        %p432 = pneg %p233
        %p433 = pneg %p230
        %p434 = pneg %p254
        %p435 = pneg %p251
        %p436 = pneg %p275
        %p437 = pneg %p272
        %p438 = pneg %p307
        %p439 = pneg %p304
        %s440 = sand.u32 %s294, 1
        %s441 = scalar_lea.sflag [#allocation15], %s440
        %s442 = sand.u32 %s294, 1
        %s443 = smul.addr %s442, 32
        %s444 = scalar_lea.vmem [#allocation16], %s443
        %p445 = scmp.eq.s32.totalorder %s35, 0
        %s446 = scalar_select %p445, %s36, 0
        %p447 = scmp.eq.s32.totalorder %s35, 0
        %s448 = scalar_select %p447, %s36, 0
        %p449 = scmp.lt.s32.totalorder %s34, 1
        %s450 = scalar_select %p449, %s34, 1
        %p451 = scmp.lt.s32.totalorder %s448, 0
        %s452 = scalar_select %p451, %s448, 0
        %s453 = sadd.s32 %s452, %s450
        %s454 = smul.addr %s453, 8
        %s455 = scalar_lea.vmem %s1, %s454
        %p456 = scmp.eq.s32.totalorder %s35, 0
        %s457 = scalar_select %p456, %s36, 0
        %p458 = scmp.eq.s32.totalorder %s35, 2
        %s459 = scalar_select %p458, %s36, 0
        %v460 = vlaneseq
        %v461 = vand.u32 %v460, 127
        %s462 = smul.u32 %s36, 128
        %v463 = vstv %s462
        %v464 = vadd.s32 %v463, %v461
        %vm465 = vcmp.lt.s32.totalorder %v464, 64
        %v466 = vsel %vm465, 1, 0
        %v467 = vcvt.s32.f32 %v466
        %p468 = scmp.eq.s32.totalorder %s35, 0
        %p469 = scmp.eq.s32.totalorder %s36, 0
        %p470 = pnand %p468, %p469
        %p471 = pneg %p470
        // Predicated region
        $region65: #{tpu_custom_call.1} parent=59 // pred_check
          _
        $region66: #{tpu_custom_call.1} parent=59 // pred_check_branch
          %473 = sbr.rel (%p470) target = $region68
        $region67: #{tpu_custom_call.1} parent=59 // pred_region
          %474 = vst [vmem:[#allocation2] sm:$0xff] 0.0
          %475 = vst [vmem:[#allocation3] sm:$0xff] 0.0
          %476 = vst [vmem:[#allocation4] sm:$0xff] 0.0
          %477 = vst [vmem:[#allocation5] sm:$0xff] 0.0
          %478 = vst [vmem:[#allocation6] sm:$0x1] 0.0
          %479 = vst [vmem:[#allocation7] sm:$0x1] 0.0
        $region68: #{tpu_custom_call.1} parent=59 // pred_fallthru
          _
        // Predicated region
        $region69: #{tpu_custom_call.1} parent=59 // pred_check
          %p480 = pneg %p468
        $region70: #{tpu_custom_call.1} parent=59 // pred_check_branch
          %482 = sbr.rel (%p480) target = $region72
        $region71: #{tpu_custom_call.1} parent=59 // pred_region
          %v483 = vld [vmem:[%s455] sm:$0xff]
          %v484 = vld [vmem:[%s2] sm:$0xff]
          %486 = vset.pattern.permute.xlu0 0
          %487 = vperm.xlu0 %486, %v484
          %v488 = vpop.permute.xlu0 %487
          %v490 = vlaneseq
          %v491 = vshrl.u32 %v490, 7
          %v492 = vsub.s32 0, %v491
          %v493 = vrot.slane %v483, %v492
          %v494 = vmul.f32 %v488, %v493
          %495 = vset.pattern.permute.xlu0 1
          %496 = vperm.xlu0 %495, %v484
          %v497 = vpop.permute.xlu0 %496
          %v499 = vlaneseq
          %v500 = vshrl.u32 %v499, 7
          %v501 = vsub.s32 1, %v500
          %v502 = vrot.slane %v483, %v501
          %v503 = vmul.f32 %v497, %v502
          %v504 = vadd.f32 %v494, %v503
          %505 = vset.pattern.permute.xlu0 2
          %506 = vperm.xlu0 %505, %v484
          %v507 = vpop.permute.xlu0 %506
          %v509 = vlaneseq
          %v510 = vshrl.u32 %v509, 7
          %v511 = vsub.s32 2, %v510
          %v512 = vrot.slane %v483, %v511
          %v513 = vmul.f32 %v507, %v512
          %v514 = vadd.f32 %v504, %v513
          %515 = vset.pattern.permute.xlu0 3
          %516 = vperm.xlu0 %515, %v484
          %v517 = vpop.permute.xlu0 %516
          %v519 = vlaneseq
          %v520 = vshrl.u32 %v519, 7
          %v521 = vsub.s32 3, %v520
          %v522 = vrot.slane %v483, %v521
          %v523 = vmul.f32 %v517, %v522
          %v524 = vadd.f32 %v514, %v523
          %525 = vset.pattern.permute.xlu0 4
          %526 = vperm.xlu0 %525, %v484
          %v527 = vpop.permute.xlu0 %526
          %v529 = vlaneseq
          %v530 = vshrl.u32 %v529, 7
          %v531 = vsub.s32 4, %v530
          %v532 = vrot.slane %v483, %v531
          %v533 = vmul.f32 %v527, %v532
          %v534 = vadd.f32 %v524, %v533
          %535 = vset.pattern.permute.xlu0 5
          %536 = vperm.xlu0 %535, %v484
          %v537 = vpop.permute.xlu0 %536
          %v539 = vlaneseq
          %v540 = vshrl.u32 %v539, 7
          %v541 = vsub.s32 5, %v540
          %v542 = vrot.slane %v483, %v541
          %v543 = vmul.f32 %v537, %v542
          %v544 = vadd.f32 %v534, %v543
          %545 = vset.pattern.permute.xlu0 6
          %546 = vperm.xlu0 %545, %v484
          %v547 = vpop.permute.xlu0 %546
          %v549 = vlaneseq
          %v550 = vshrl.u32 %v549, 7
          %v551 = vsub.s32 6, %v550
          %v552 = vrot.slane %v483, %v551
          %v553 = vmul.f32 %v547, %v552
          %v554 = vadd.f32 %v544, %v553
          %555 = vset.pattern.permute.xlu0 7
          %556 = vperm.xlu0 %555, %v484
          %v557 = vpop.permute.xlu0 %556
          %v559 = vlaneseq
          %v560 = vshrl.u32 %v559, 7
          %v561 = vsub.s32 7, %v560
          %v562 = vrot.slane %v483, %v561
          %v563 = vmul.f32 %v557, %v562
          %v564 = vadd.f32 %v554, %v563
          %v565 = vld [vmem:[%s3] sm:$0xff]
          %567 = vset.pattern.permute.xlu0 0
          %568 = vperm.xlu0 %567, %v565
          %v569 = vpop.permute.xlu0 %568
          %v571 = vadd.f32 %v564, %v569
          %v572 = vld [vmem:[%s6] sm:$0xff]
          %574 = vset.pattern.permute.xlu0 0
          %575 = vperm.xlu0 %574, %v572
          %v576 = vpop.permute.xlu0 %575
          %v578 = vlaneseq
          %v579 = vshrl.u32 %v578, 7
          %v580 = vsub.s32 0, %v579
          %v581 = vrot.slane %v571, %v580
          %v582 = vmul.f32 %v576, %v581
          %583 = vset.pattern.permute.xlu0 1
          %584 = vperm.xlu0 %583, %v572
          %v585 = vpop.permute.xlu0 %584
          %v587 = vlaneseq
          %v588 = vshrl.u32 %v587, 7
          %v589 = vsub.s32 1, %v588
          %v590 = vrot.slane %v571, %v589
          %v591 = vmul.f32 %v585, %v590
          %v592 = vadd.f32 %v582, %v591
          %593 = vset.pattern.permute.xlu0 2
          %594 = vperm.xlu0 %593, %v572
          %v595 = vpop.permute.xlu0 %594
          %v597 = vlaneseq
          %v598 = vshrl.u32 %v597, 7
          %v599 = vsub.s32 2, %v598
          %v600 = vrot.slane %v571, %v599
          %v601 = vmul.f32 %v595, %v600
          %v602 = vadd.f32 %v592, %v601
          %603 = vset.pattern.permute.xlu0 3
          %604 = vperm.xlu0 %603, %v572
          %v605 = vpop.permute.xlu0 %604
          %v607 = vlaneseq
          %v608 = vshrl.u32 %v607, 7
          %v609 = vsub.s32 3, %v608
          %v610 = vrot.slane %v571, %v609
          %v611 = vmul.f32 %v605, %v610
          %v612 = vadd.f32 %v602, %v611
          %613 = vset.pattern.permute.xlu0 4
          %614 = vperm.xlu0 %613, %v572
          %v615 = vpop.permute.xlu0 %614
          %v617 = vlaneseq
          %v618 = vshrl.u32 %v617, 7
          %v619 = vsub.s32 4, %v618
          %v620 = vrot.slane %v571, %v619
          %v621 = vmul.f32 %v615, %v620
          %v622 = vadd.f32 %v612, %v621
          %623 = vset.pattern.permute.xlu0 5
          %624 = vperm.xlu0 %623, %v572
          %v625 = vpop.permute.xlu0 %624
          %v627 = vlaneseq
          %v628 = vshrl.u32 %v627, 7
          %v629 = vsub.s32 5, %v628
          %v630 = vrot.slane %v571, %v629
          %v631 = vmul.f32 %v625, %v630
          %v632 = vadd.f32 %v622, %v631
          %633 = vset.pattern.permute.xlu0 6
          %634 = vperm.xlu0 %633, %v572
          %v635 = vpop.permute.xlu0 %634
          %v637 = vlaneseq
          %v638 = vshrl.u32 %v637, 7
          %v639 = vsub.s32 6, %v638
          %v640 = vrot.slane %v571, %v639
          %v641 = vmul.f32 %v635, %v640
          %v642 = vadd.f32 %v632, %v641
          %643 = vset.pattern.permute.xlu0 7
          %644 = vperm.xlu0 %643, %v572
          %v645 = vpop.permute.xlu0 %644
          %v647 = vlaneseq
          %v648 = vshrl.u32 %v647, 7
          %v649 = vsub.s32 7, %v648
          %v650 = vrot.slane %v571, %v649
          %v651 = vmul.f32 %v645, %v650
          %v652 = vadd.f32 %v642, %v651
          %v653 = vld [vmem:[%s7] sm:$0xff]
          %655 = vset.pattern.permute.xlu0 0
          %656 = vperm.xlu0 %655, %v653
          %v657 = vpop.permute.xlu0 %656
          %v659 = vadd.f32 %v652, %v657
          %s660 = smul.u32 %s36, 8
          %s661 = scalar_lea.vmem [#allocation9], %s660
          %662 = vst [vmem:[%s661] sm:$0xff] %v571
          %s663 = scalar_lea.vmem [#allocation10], %s660
          %664 = vst [vmem:[%s663] sm:$0xff] %v659
          %v665 = vmul.f32 %v659, %v467
          %v666 = vld [vmem:[#allocation4] sm:$0xff]
          %v667 = vadd.f32 %v666, %v665
          %668 = vst [vmem:[#allocation4] sm:$0xff] %v667
          %v669 = vmul.f32 %v665, %v665
          %v670 = vld [vmem:[#allocation5] sm:$0xff]
          %v671 = vadd.f32 %v670, %v669
          %672 = vst [vmem:[#allocation5] sm:$0xff] %v671
          loop: start=0, step=1, limit=4
          $region73: #{tpu_custom_call.1} parent=71 // loop_pre_header
            _
          $region74: #{tpu_custom_call.1} parent=71 // loop_header
            %s674 = sphi 0, %s678
            %p675 = scmp.ge.s32.totalorder %s674, 4
          $region75: #{tpu_custom_call.1} parent=71 // loop_header_branch
            %677 = sbr.rel (%p675) target = $region79
          $region76: #{tpu_custom_call.1} parent=71 // loop_body
            %s679 = smul.u32 %s674, 8
            %s680 = scalar_lea.vmem %s399, %s679 [#allocation13]
            %v681 = vld [vmem:[%s680] sm:$0xff]
            %v682 = vld [vmem:[%s4] sm:$0xff]
            %684 = vset.pattern.permute.xlu0 0
            %685 = vperm.xlu0 %684, %v682
            %v686 = vpop.permute.xlu0 %685
            %v688 = vlaneseq
            %v689 = vshrl.u32 %v688, 7
            %v690 = vsub.s32 0, %v689
            %v691 = vrot.slane %v681, %v690
            %v692 = vmul.f32 %v686, %v691
            %693 = vset.pattern.permute.xlu0 1
            %694 = vperm.xlu0 %693, %v682
            %v695 = vpop.permute.xlu0 %694
            %v697 = vlaneseq
            %v698 = vshrl.u32 %v697, 7
            %v699 = vsub.s32 1, %v698
            %v700 = vrot.slane %v681, %v699
            %v701 = vmul.f32 %v695, %v700
            %v702 = vadd.f32 %v692, %v701
            %703 = vset.pattern.permute.xlu0 2
            %704 = vperm.xlu0 %703, %v682
            %v705 = vpop.permute.xlu0 %704
            %v707 = vlaneseq
            %v708 = vshrl.u32 %v707, 7
            %v709 = vsub.s32 2, %v708
            %v710 = vrot.slane %v681, %v709
            %v711 = vmul.f32 %v705, %v710
            %v712 = vadd.f32 %v702, %v711
            %713 = vset.pattern.permute.xlu0 3
            %714 = vperm.xlu0 %713, %v682
            %v715 = vpop.permute.xlu0 %714
            %v717 = vlaneseq
            %v718 = vshrl.u32 %v717, 7
            %v719 = vsub.s32 3, %v718
            %v720 = vrot.slane %v681, %v719
            %v721 = vmul.f32 %v715, %v720
            %v722 = vadd.f32 %v712, %v721
            %723 = vset.pattern.permute.xlu0 4
            %724 = vperm.xlu0 %723, %v682
            %v725 = vpop.permute.xlu0 %724
            %v727 = vlaneseq
            %v728 = vshrl.u32 %v727, 7
            %v729 = vsub.s32 4, %v728
            %v730 = vrot.slane %v681, %v729
            %v731 = vmul.f32 %v725, %v730
            %v732 = vadd.f32 %v722, %v731
            %733 = vset.pattern.permute.xlu0 5
            %734 = vperm.xlu0 %733, %v682
            %v735 = vpop.permute.xlu0 %734
            %v737 = vlaneseq
            %v738 = vshrl.u32 %v737, 7
            %v739 = vsub.s32 5, %v738
            %v740 = vrot.slane %v681, %v739
            %v741 = vmul.f32 %v735, %v740
            %v742 = vadd.f32 %v732, %v741
            %743 = vset.pattern.permute.xlu0 6
            %744 = vperm.xlu0 %743, %v682
            %v745 = vpop.permute.xlu0 %744
            %v747 = vlaneseq
            %v748 = vshrl.u32 %v747, 7
            %v749 = vsub.s32 6, %v748
            %v750 = vrot.slane %v681, %v749
            %v751 = vmul.f32 %v745, %v750
            %v752 = vadd.f32 %v742, %v751
            %753 = vset.pattern.permute.xlu0 7
            %754 = vperm.xlu0 %753, %v682
            %v755 = vpop.permute.xlu0 %754
            %v757 = vlaneseq
            %v758 = vshrl.u32 %v757, 7
            %v759 = vsub.s32 7, %v758
            %v760 = vrot.slane %v681, %v759
            %v761 = vmul.f32 %v755, %v760
            %v762 = vadd.f32 %v752, %v761
            %v763 = vld [vmem:[%s5] sm:$0xff]
            %765 = vset.pattern.permute.xlu0 0
            %766 = vperm.xlu0 %765, %v763
            %v767 = vpop.permute.xlu0 %766
            %v769 = vadd.f32 %v762, %v767
            %s770 = sadd.s32 %s674, %s36
            %s771 = smul.u32 %s770, 8
            %s772 = scalar_lea.vmem [#allocation11], %s771
            %773 = vst [vmem:[%s772] sm:$0xff] %v769
            %v774 = vmul.f32 %v769, %v467
            %v775 = vld [vmem:[#allocation2] sm:$0xff]
            %v776 = vadd.f32 %v775, %v774
            %777 = vst [vmem:[#allocation2] sm:$0xff] %v776
            %v778 = vmul.f32 %v774, %v774
            %v779 = vld [vmem:[#allocation3] sm:$0xff]
            %v780 = vadd.f32 %v779, %v778
            %781 = vst [vmem:[#allocation3] sm:$0xff] %v780
          $region77: #{tpu_custom_call.1} parent=71 // loop_footer
            %s678 = sadd.s32 1, %s674
          $region78: #{tpu_custom_call.1} parent=71 // loop_footer_branch
            %673 = sbr.rel target = $region74
          $region79: #{tpu_custom_call.1} parent=71 // loop_exit
            _
        $region72: #{tpu_custom_call.1} parent=59 // pred_fallthru
          _
        %p782 = scmp.eq.s32.totalorder %s35, 1
        // Predicated region
        $region80: #{tpu_custom_call.1} parent=59 // pred_check
          %p783 = pneg %p782
        $region81: #{tpu_custom_call.1} parent=59 // pred_check_branch
          %785 = sbr.rel (%p783) target = $region83
        $region82: #{tpu_custom_call.1} parent=59 // pred_region
          %v786 = vld [vmem:[#allocation2] sm:$0xff]
          %787 = vadd.xlane.f32.xlu0 %v786
          %v788 = vpop.xlane.xlu0 %787
          %v789 = vmul.f32 %v788, 0.00390625
          %v790 = vld [vmem:[#allocation3] sm:$0xff]
          %791 = vadd.xlane.f32.xlu0 %v790
          %v792 = vpop.xlane.xlu0 %791
          %v793 = vmul.f32 %v792, 0.00390625
          %v794 = vmul.f32 %v789, %v789
          %v795 = vsub.f32 %v793, %v794
          %v796 = vmax.f32 %v795, 0.0
          %v797 = vadd.f32 %v796, 1e-05
          %v798 = vrsqrt.pop %v797
          %v799 = vld [vmem:[#allocation4] sm:$0xff]
          %800 = vadd.xlane.f32.xlu0 %v799
          %v801 = vpop.xlane.xlu0 %800
          %v802 = vmul.f32 %v801, 0.015625
          %v803 = vld [vmem:[#allocation5] sm:$0xff]
          %804 = vadd.xlane.f32.xlu0 %v803
          %v805 = vpop.xlane.xlu0 %804
          %v806 = vmul.f32 %v805, 0.015625
          %v807 = vmul.f32 %v802, %v802
          %v808 = vsub.f32 %v806, %v807
          %v809 = vmax.f32 %v808, 0.0
          %v810 = vadd.f32 %v809, 1e-05
          %v811 = vrsqrt.pop %v810
          %s812 = smul.u32 %s36, 8
          %s813 = scalar_lea.vmem [#allocation10], %s812
          %v814 = vld [vmem:[%s813] sm:$0xff]
          %v815 = vsub.f32 %v814, %v802
          %v816 = vmul.f32 %v815, %v811
          %v817 = vld [vmem:[%s8] sm:$0xff]
          %v818 = vld [vmem:[#allocation12] sm:$0x1]
          %s819 = scalar_lea.vmem [#allocation11], %s812
          %v820 = vld [vmem:[%s819] sm:$0xff]
          %v821 = vsub.f32 %v820, %v789
          %v822 = vmul.f32 %v821, %v798
          %v823 = vadd.f32 %v822, %v816
          %v824 = vmax.f32 %v823, 0.0
          %826 = vset.pattern.permute.xlu0 0
          %827 = vperm.xlu0 %826, %v817
          %v828 = vpop.permute.xlu0 %827
          %v830 = vmul.f32 %v824, %v828
          %v831 = vrot.slane %v830, 4
          %v832 = vadd.f32 %v830, %v831
          %v833 = vrot.slane %v832, 2
          %v834 = vadd.f32 %v832, %v833
          %v835 = vrot.slane %v834, 1
          %v836 = vadd.f32 %v834, %v835
          %838 = vset.pattern.permute.xlu0 0
          %839 = vperm.xlu0 %838, %v818
          %v840 = vpop.permute.xlu0 %839
          %v842 = vlaneseq
          %v843 = vshrl.u32 %v842, 7
          %v844 = vsub.s32 0, %v843
          %v845 = vrot.slane %v840, %v844
          %v846 = vadd.f32 %v836, %v845
          %s847 = smul.u32 %s36, 4
          %s848 = scalar_lea.vmem [#allocation8], %s847
          %849 = vst [vmem:[%s848] sm:$0x1] %v846
          %v850 = vmul.f32 %v846, %v467
          %v851 = vld [vmem:[#allocation6] sm:$0x1]
          %v852 = vadd.f32 %v851, %v850
          %853 = vst [vmem:[#allocation6] sm:$0x1] %v852
          %v854 = vmul.f32 %v850, %v850
          %v855 = vld [vmem:[#allocation7] sm:$0x1]
          %v856 = vadd.f32 %v855, %v854
          %857 = vst [vmem:[#allocation7] sm:$0x1] %v856
          %s858 = sadd.s32 %s36, 1
          %s859 = smul.u32 %s858, 8
          %s860 = scalar_lea.vmem [#allocation11], %s859
          %v861 = vld [vmem:[%s860] sm:$0xff]
          %v862 = vsub.f32 %v861, %v789
          %v863 = vmul.f32 %v862, %v798
          %v864 = vadd.f32 %v863, %v816
          %v865 = vmax.f32 %v864, 0.0
          %v866 = vmul.f32 %v865, %v828
          %v867 = vrot.slane %v866, 4
          %v868 = vadd.f32 %v866, %v867
          %v869 = vrot.slane %v868, 2
          %v870 = vadd.f32 %v868, %v869
          %v871 = vrot.slane %v870, 1
          %v872 = vadd.f32 %v870, %v871
          %v873 = vadd.f32 %v872, %v845
          %874 = vst [vmem:[%s848 + $0x1] sm:$0x1] %v873
          %v875 = vmul.f32 %v873, %v467
          %v876 = vld [vmem:[#allocation6] sm:$0x1]
          %v877 = vadd.f32 %v876, %v875
          %878 = vst [vmem:[#allocation6] sm:$0x1] %v877
          %v879 = vmul.f32 %v875, %v875
          %v880 = vld [vmem:[#allocation7] sm:$0x1]
          %v881 = vadd.f32 %v880, %v879
          %882 = vst [vmem:[#allocation7] sm:$0x1] %v881
          %s883 = sadd.s32 %s36, 2
          %s884 = smul.u32 %s883, 8
          %s885 = scalar_lea.vmem [#allocation11], %s884
          %v886 = vld [vmem:[%s885] sm:$0xff]
          %v887 = vsub.f32 %v886, %v789
          %v888 = vmul.f32 %v887, %v798
          %v889 = vadd.f32 %v888, %v816
          %v890 = vmax.f32 %v889, 0.0
          %v891 = vmul.f32 %v890, %v828
          %v892 = vrot.slane %v891, 4
          %v893 = vadd.f32 %v891, %v892
          %v894 = vrot.slane %v893, 2
          %v895 = vadd.f32 %v893, %v894
          %v896 = vrot.slane %v895, 1
          %v897 = vadd.f32 %v895, %v896
          %v898 = vadd.f32 %v897, %v845
          %899 = vst [vmem:[%s848 + $0x2] sm:$0x1] %v898
          %v900 = vmul.f32 %v898, %v467
          %v901 = vld [vmem:[#allocation6] sm:$0x1]
          %v902 = vadd.f32 %v901, %v900
          %903 = vst [vmem:[#allocation6] sm:$0x1] %v902
          %v904 = vmul.f32 %v900, %v900
          %v905 = vld [vmem:[#allocation7] sm:$0x1]
          %v906 = vadd.f32 %v905, %v904
          %907 = vst [vmem:[#allocation7] sm:$0x1] %v906
          %s908 = sadd.s32 %s36, 3
          %s909 = smul.u32 %s908, 8
          %s910 = scalar_lea.vmem [#allocation11], %s909
          %v911 = vld [vmem:[%s910] sm:$0xff]
          %v912 = vsub.f32 %v911, %v789
          %v913 = vmul.f32 %v912, %v798
          %v914 = vadd.f32 %v913, %v816
          %v915 = vmax.f32 %v914, 0.0
          %v916 = vmul.f32 %v915, %v828
          %v917 = vrot.slane %v916, 4
          %v918 = vadd.f32 %v916, %v917
          %v919 = vrot.slane %v918, 2
          %v920 = vadd.f32 %v918, %v919
          %v921 = vrot.slane %v920, 1
          %v922 = vadd.f32 %v920, %v921
          %v923 = vadd.f32 %v922, %v845
          %924 = vst [vmem:[%s848 + $0x3] sm:$0x1] %v923
          %v925 = vmul.f32 %v923, %v467
          %v926 = vld [vmem:[#allocation6] sm:$0x1]
          %v927 = vadd.f32 %v926, %v925
          %928 = vst [vmem:[#allocation6] sm:$0x1] %v927
          %v929 = vmul.f32 %v925, %v925
          %v930 = vld [vmem:[#allocation7] sm:$0x1]
          %v931 = vadd.f32 %v930, %v929
          %932 = vst [vmem:[#allocation7] sm:$0x1] %v931
        $region83: #{tpu_custom_call.1} parent=59 // pred_fallthru
          _
        %p933 = scmp.eq.s32.totalorder %s35, 2
        // Predicated region
        $region84: #{tpu_custom_call.1} parent=59 // pred_check
          %p934 = pneg %p933
        $region85: #{tpu_custom_call.1} parent=59 // pred_check_branch
          %936 = sbr.rel (%p934) target = $region87
        $region86: #{tpu_custom_call.1} parent=59 // pred_region
          %v937 = vld [vmem:[#allocation6] sm:$0x1]
          %vm938 = vcmask 1040384
          %v939 = vsel %vm938, %v937, 0.0
          %940 = vadd.xlane.f32.xlu0 %v939
          %v941 = vpop.xlane.xlu0 %940
          %v942 = vmul.f32 %v941, 0.00390625
          %v943 = vld [vmem:[#allocation7] sm:$0x1]
          %v944 = vsel %vm938, %v943, 0.0
          %945 = vadd.xlane.f32.xlu0 %v944
          %v946 = vpop.xlane.xlu0 %945
          %v947 = vmul.f32 %v946, 0.00390625
          %v948 = vmul.f32 %v942, %v942
          %v949 = vsub.f32 %v947, %v948
          %v950 = vmax.f32 %v949, 0.0
          %v951 = vadd.f32 %v950, 1e-05
          %v952 = vrsqrt.pop %v951
          %s953 = smul.u32 %s36, 8
          %s954 = scalar_lea.vmem [#allocation9], %s953
          %v955 = vld [vmem:[%s954] sm:$0xff]
          %s956 = smul.u32 %s36, 4
          %s957 = scalar_lea.vmem [#allocation8], %s956
          %v958 = vld [vmem:[%s957] sm:$0x1]
          %v959 = vsub.f32 %v958, %v942
          %v960 = vmul.f32 %v959, %v952
          %v961 = vxor.u32 %v960, 2147483648
          %v962 = vmul.f32 %v961, 1.442695
          %v963 = vpow.pop %v962
          %v964 = vadd.f32 %v963, 1.0
          %v965 = vrcp.pop %v964
          %v966 = vmul.f32 1.0, %v965
          %v967 = vlaneseq
          %v968 = vshrl.u32 %v967, 7
          %v969 = vsub.s32 0, %v968
          %v970 = vrot.slane %v966, %v969
          %v971 = vmul.f32 %v955, %v970
          %972 = vst [vmem:[%s444] sm:$0xff] %v971
          %v973 = vld [vmem:[%s957 + $0x1] sm:$0x1]
          %v974 = vsub.f32 %v973, %v942
          %v975 = vmul.f32 %v974, %v952
          %v976 = vxor.u32 %v975, 2147483648
          %v977 = vmul.f32 %v976, 1.442695
          %v978 = vpow.pop %v977
          %v979 = vadd.f32 %v978, 1.0
          %v980 = vrcp.pop %v979
          %v981 = vmul.f32 1.0, %v980
          %v982 = vlaneseq
          %v983 = vshrl.u32 %v982, 7
          %v984 = vsub.s32 0, %v983
          %v985 = vrot.slane %v981, %v984
          %v986 = vmul.f32 %v955, %v985
          %s987 = scalar_lea.vmem %s444, 8 [#allocation16]
          %988 = vst [vmem:[%s987] sm:$0xff] %v986
          %v989 = vld [vmem:[%s957 + $0x2] sm:$0x1]
          %v990 = vsub.f32 %v989, %v942
          %v991 = vmul.f32 %v990, %v952
          %v992 = vxor.u32 %v991, 2147483648
          %v993 = vmul.f32 %v992, 1.442695
          %v994 = vpow.pop %v993
          %v995 = vadd.f32 %v994, 1.0
          %v996 = vrcp.pop %v995
          %v997 = vmul.f32 1.0, %v996
          %v998 = vlaneseq
          %v999 = vshrl.u32 %v998, 7
          %v1000 = vsub.s32 0, %v999
          %v1001 = vrot.slane %v997, %v1000
          %v1002 = vmul.f32 %v955, %v1001
          %s1003 = scalar_lea.vmem %s444, 16 [#allocation16]
          %1004 = vst [vmem:[%s1003] sm:$0xff] %v1002
          %v1005 = vld [vmem:[%s957 + $0x3] sm:$0x1]
          %v1006 = vsub.f32 %v1005, %v942
          %v1007 = vmul.f32 %v1006, %v952
          %v1008 = vxor.u32 %v1007, 2147483648
          %v1009 = vmul.f32 %v1008, 1.442695
          %v1010 = vpow.pop %v1009
          %v1011 = vadd.f32 %v1010, 1.0
          %v1012 = vrcp.pop %v1011
          %v1013 = vmul.f32 1.0, %v1012
          %v1014 = vlaneseq
          %v1015 = vshrl.u32 %v1014, 7
          %v1016 = vsub.s32 0, %v1015
          %v1017 = vrot.slane %v1013, %v1016
          %v1018 = vmul.f32 %v955, %v1017
          %s1019 = scalar_lea.vmem %s444, 24 [#allocation16]
          %1020 = vst [vmem:[%s1019] sm:$0xff] %v1018
        $region87: #{tpu_custom_call.1} parent=59 // pred_fallthru
          _
        %s1021 = sand.u32 %s294, 1
        %s1022 = scalar_lea.sflag [#allocation15], %s1021
        %s1023 = sand.u32 %s294, 1
        %s1024 = smul.addr %s1023, 32
        %s1025 = scalar_lea.vmem [#allocation16], %s1024
        // Predicated region
        $region88: #{tpu_custom_call.1} parent=59 // pred_check
          %p1026 = pneg %p304
        $region89: #{tpu_custom_call.1} parent=59 // pred_check_branch
          %1028 = sbr.rel (%p1026) target = $region91
        $region90: #{tpu_custom_call.1} parent=59 // pred_region
          %p1029 = scmp.eq.s32.totalorder %s35, 2
          %s1030 = scalar_select %p1029, %s36, 0
          %s1032 = ssub.s32 512, 512
          %1033 = vsyncadd %s1022, %s1032
          %s1034 = smul.addr %s34, 4
          %s1035 = sadd.s32 %s1030, %s1034
          %s1036 = smul.addr %s1035, 128
          %s1037 = scalar_lea.hbm %s10, %s1036
          %s1038 = sshll.u32 %s1025, 4
          %s1039 = int_to_ptr.vmem [resolvable:$true] %s1038
          %1044 = dma.vmem_to_hbm [thread:$0]  %s1039, 512, %s1037, %s1022, 128, 128, 8
        $region91: #{tpu_custom_call.1} parent=59 // pred_fallthru
          _
      $region60: #{tpu_custom_call.1} parent=5 // pred_fallthru
        _
      %p1045 = scmp.le.s32.totalorder 2, %s24
      // Predicated region
      $region92: #{tpu_custom_call.1} parent=5 // pred_check
        %p1046 = pneg %p1045
      $region93: #{tpu_custom_call.1} parent=5 // pred_check_branch
        %1048 = sbr.rel (%p1046) target = $region95
      $region94: #{tpu_custom_call.1} parent=5 // pred_region
        %s1049 = ssub.s32 %s24, 2
        // Predicated region
        $region96: #{tpu_custom_call.1} parent=94 // pred_check
          %p1050 = pneg %p310
        $region97: #{tpu_custom_call.1} parent=94 // pred_check_branch
          %1052 = sbr.rel (%p1050) target = $region99
        $region98: #{tpu_custom_call.1} parent=94 // pred_region
          %s1053 = sand.u32 %s295, 1
          %s1054 = scalar_lea.sflag [#allocation15], %s1053
          %s1055 = sand.u32 %s295, 1
          %s1056 = smul.addr %s1055, 32
          %s1057 = scalar_lea.vmem [#allocation16], %s1056
          %1058 = dma.done %s1054, 512
        $region99: #{tpu_custom_call.1} parent=94 // pred_fallthru
          _
      $region95: #{tpu_custom_call.1} parent=5 // pred_fallthru
        _
    $region6: #{tpu_custom_call.1} parent=1 // loop_footer
      %s28 = sadd.s32 1, %s24
    $region7: #{tpu_custom_call.1} parent=1 // loop_footer_branch
      %23 = sbr.rel target = $region3
    $region8: #{tpu_custom_call.1} parent=1 // loop_exit
      _
    %1059 = vsyncpa [#allocation14], 1
    %s1060 = scalar_lea.sflag [#allocation14], 1
    %1061 = vsyncpa %s1060, 1
    %1062 = vsyncpa [#allocation15], 1
    %s1063 = scalar_lea.sflag [#allocation15], 1
    %1064 = vsyncpa %s1063, 1

</llo_original>
